<compile_context>
chip_gen: v7x
topology: tpu7x:2x2x1
jax: 0.10.0
libtpu: 0.0.40
codegen_flags: <defaults>
</compile_context>

<pallas_src>
import functools

import jax
import jax.numpy as jnp
from jax.experimental import pallas as pl
from jax.experimental.pallas import tpu as pltpu

NEG_SLOPE = 0.2  # LeakyReLU slope used by the EDSR/AWSRN discriminator


def _leaky(x):
    return jnp.where(x >= 0.0, x, NEG_SLOPE * x)


def _softplus(x):  # stable log(1 + exp(x))
    return jnp.maximum(x, 0.0) + jnp.log1p(jnp.exp(-jnp.abs(x)))


# --------------------------------------------------------------------------
# Single fused Pallas kernel: discriminator (on [fake;real]) + GAN losses
# --------------------------------------------------------------------------
def _fused_disc_loss_kernel(x_ref,
                            bw1_ref, sh1_ref, b1_ref,
                            bw2_ref, sh2_ref, b2_ref,
                            bw3_ref, sh3_ref, b3_ref,
                            sel_ref, w1_ref, bfc1_ref,
                            w2_ref, bfc2_ref,
                            loss_ref, *, n_fake, n_spatial_rows):
    def conv(x_bf, bw_ref, sh_ref, b_ref):
        # Y = sum_ky (ShB[ky] @ X) @ BigW[ky]   -- 6 small 2-D MXU matmuls
        rows = sh_ref.shape[1]
        lanes = bw_ref.shape[2]
        acc = jnp.zeros((rows, lanes), jnp.float32)
        for ky in range(3):                      # static unroll (trip count 3)
            u = jnp.dot(sh_ref[ky], x_bf,
                        preferred_element_type=jnp.float32).astype(jnp.bfloat16)
            acc = acc + jnp.dot(u, bw_ref[ky],
                                preferred_element_type=jnp.float32)
        return _leaky(acc + b_ref[...])          # f32 epilogue

    x = x_ref[...]                                            # (B*H, W*C0) bf16
    y1 = conv(x, bw1_ref, sh1_ref, b1_ref)                    # (B*16, 16*8)  f32
    y2 = conv(y1.astype(jnp.bfloat16), bw2_ref, sh2_ref, b2_ref)  # (B*8, 8*16)
    y3 = conv(y2.astype(jnp.bfloat16), bw3_ref, sh3_ref, b3_ref)  # (B*4, 4*16)
    y3b = y3.astype(jnp.bfloat16)

    # fc1: NHWC flatten folded into per-spatial-row weight blocks.
    n_batch = sel_ref.shape[1]
    acc = jnp.zeros((n_batch, w1_ref.shape[2]), jnp.float32)
    for i in range(n_spatial_rows):              # static unroll (trip count 4)
        r = jnp.dot(sel_ref[i], y3b,
                    preferred_element_type=jnp.float32).astype(jnp.bfloat16)
        acc = acc + jnp.dot(r, w1_ref[i], preferred_element_type=jnp.float32)
    h = _leaky(acc + bfc1_ref[...])

    # fc2 -> logits (B, 1)
    logits = jnp.dot(h.astype(jnp.bfloat16), w2_ref[...],
                     preferred_element_type=jnp.float32) + bfc2_ref[...]

    d_fake = logits[:n_fake, :]
    d_real = logits[n_fake:, :]
    # Vanilla-GAN BCE-with-logits losses, written as two scalars to SMEM.
    loss_ref[0] = jnp.mean(_softplus(d_fake)) + jnp.mean(_softplus(-d_real))
    loss_ref[1] = jnp.mean(_softplus(-d_fake))


# --------------------------------------------------------------------------
# Parameter init (self-defined, scaled-down AWSRN-style discriminator)
# --------------------------------------------------------------------------
def init_discriminator_params(key, n_colors=3, patch_size=16):
    """conv3x3(n_colors->8,s1)+LReLU, conv3x3(8->16,s2)+LReLU,
       conv3x3(16->16,s2)+LReLU, flatten (NHWC order) ->
       Linear(16*(p/4)^2 -> 32)+LReLU -> Linear(32 -> 1)."""
    def conv_w(k, cin, cout):
        return jax.random.normal(k, (3, 3, cin, cout), jnp.float32) / (3 * 3 * cin) ** 0.5

    def lin_w(k, cin, cout):
        return jax.random.normal(k, (cin, cout), jnp.float32) / cin ** 0.5

    ks = jax.random.split(key, 5)
    fdim = 16 * (patch_size // 4) ** 2
    return {
        "conv1_w": conv_w(ks[0], n_colors, 8), "conv1_b": jnp.zeros((8,), jnp.float32),
        "conv2_w": conv_w(ks[1], 8, 16),       "conv2_b": jnp.zeros((16,), jnp.float32),
        "conv3_w": conv_w(ks[2], 16, 16),      "conv3_b": jnp.zeros((16,), jnp.float32),
        "fc1_w": lin_w(ks[3], fdim, 32),       "fc1_b": jnp.zeros((32,), jnp.float32),
        "fc2_w": lin_w(ks[4], 32, 1),          "fc2_b": jnp.zeros((1,), jnp.float32),
    }


# --------------------------------------------------------------------------
# Adversarial.forward (gan_type == 'GAN')
# --------------------------------------------------------------------------
def adversarial_forward(fake, real, params, gan_type="GAN", gan_k=1):
    if gan_type != "GAN":
        raise NotImplementedError("only gan_type='GAN' is implemented")
    fake_detach = jax.lax.stop_gradient(fake)                  # fake.detach()

    # Batch fake and real through one shared-weight discriminator pass.
    x = jnp.concatenate([fake_detach, real], axis=0)           # (2N, C, H, W)
    b2, c0, h0, w0 = x.shape
    n_fake = fake.shape[0]
    # NCHW -> 2-D slab: rows = (b, h), lanes = (w, c)
    x2 = jnp.transpose(x, (0, 2, 3, 1)).reshape(b2 * h0, w0 * c0).astype(jnp.bfloat16)

    # ---- Build structured (banded / block-diag selection) weight matrices ----
    eye_b = jnp.eye(b2, dtype=jnp.float32)
    k3 = jnp.arange(3)
    bw_list, shb_list, bias_list = [], [], []
    h_cur, w_cur = h0, w0
    for name, stride in (("conv1", 1), ("conv2", 2), ("conv3", 2)):
        wgt = params[name + "_w"]                              # (3,3,Cin,Cout)
        bia = params[name + "_b"]
        cin, cout = wgt.shape[2], wgt.shape[3]
        h_out = (h_cur + 2 - 3) // stride + 1
        w_out = (w_cur + 2 - 3) // stride + 1
        # Column (W) taps + stride + zero pad folded into the weights.
        wpos = jnp.arange(w_cur)[None, :, None]
        jpos = jnp.arange(w_out)[None, None, :]
        p = (wpos == stride * jpos + k3[:, None, None] - 1).astype(jnp.float32)  # (3,Win,Wout)
        bigw = jnp.einsum("xwj,yxcd->ywcjd", p, wgt).reshape(
            3, w_cur * cin, w_out * cout)
        # Row (H) taps + stride + zero pad as block-diag 0/1 selection matrices.
        hpos = jnp.arange(h_cur)[None, None, :]
        ipos = jnp.arange(h_out)[None, :, None]
        sh = (hpos == stride * ipos + k3[:, None, None] - 1).astype(jnp.float32)  # (3,Ho,Hin)
        shb = jnp.stack([jnp.kron(eye_b, sh[ky]) for ky in range(3)])
        bw_list.append(bigw.astype(jnp.bfloat16))
        shb_list.append(shb.astype(jnp.bfloat16))
        bias_list.append(jnp.tile(bia, w_out)[None, :].astype(jnp.float32))
        h_cur, w_cur = h_out, w_out

    c_last = params["conv3_w"].shape[-1]
    feat_lanes = w_cur * c_last
    # Per-sample row selector for the flatten: sel[i, b, r] = (r == b*Ho3 + i)
    i_idx = jnp.arange(h_cur)[:, None, None]
    b_idx = jnp.arange(b2)[None, :, None]
    r_idx = jnp.arange(b2 * h_cur)[None, None, :]
    sel = (r_idx == b_idx * h_cur + i_idx).astype(jnp.bfloat16)
    w1 = params["fc1_w"].reshape(h_cur, feat_lanes, -1).astype(jnp.bfloat16)
    bfc1 = params["fc1_b"][None, :].astype(jnp.float32)
    w2 = params["fc2_w"].astype(jnp.bfloat16)
    bfc2 = params["fc2_b"][None, :].astype(jnp.float32)

    kernel = functools.partial(_fused_disc_loss_kernel,
                               n_fake=n_fake, n_spatial_rows=h_cur)
    # Single gridless call; ~250 KB of operands -> fits VMEM on v5e/v6e/v7x.
    # (For much larger batch/patch sizes, add an M-parallel grid over rows.)
    losses = pl.pallas_call(
        kernel,
        out_shape=jax.ShapeDtypeStruct((2,), jnp.float32),
        out_specs=pl.BlockSpec(memory_space=pltpu.MemorySpace.SMEM),
    )(x2,
      bw_list[0], shb_list[0], bias_list[0],
      bw_list[1], shb_list[1], bias_list[1],
      bw_list[2], shb_list[2], bias_list[2],
      sel, w1, bfc1, w2, bfc2)

    # TODO(synk): loss_d.backward() + optimizer.step() + scheduler (the gan_k
    # discriminator training iterations) are host-side training side effects
    # with no Pallas equivalent; weights stay fixed, so every iteration yields
    # the same loss_d and D(fake) == D(fake.detach()) for the generator loss.
    loss_d = losses[0]          # == self.loss (averaged over gan_k identical iters)
    loss_g = losses[1]          # value returned by Adversarial.forward
    return loss_g, loss_d


# --------------------------------------------------------------------------
# Pure-JAX reference for a sanity check
# --------------------------------------------------------------------------
def _reference(fake, real, p):
    def disc(x):
        y = jnp.transpose(x, (0, 2, 3, 1))
        for name, stride in (("conv1", 1), ("conv2", 2), ("conv3", 2)):
            y = jax.lax.conv_general_dilated(
                y, p[name + "_w"], (stride, stride), [(1, 1), (1, 1)],
                dimension_numbers=("NHWC", "HWIO", "NHWC"))
            y = _leaky(y + p[name + "_b"])
        feat = y.reshape(y.shape[0], -1)          # NHWC flatten (matches fc1_w)
        h = _leaky(feat @ p["fc1_w"] + p["fc1_b"])
        return h @ p["fc2_w"] + p["fc2_b"]

    d_fake, d_real = disc(fake), disc(real)
    loss_d = jnp.mean(_softplus(d_fake)) + jnp.mean(_softplus(-d_real))
    loss_g = jnp.mean(_softplus(-d_fake))
    return loss_g, loss_d


if __name__ == "__main__":
    key = jax.random.PRNGKey(0)
    k_fake, k_real, k_params = jax.random.split(key, 3)

    fake = jax.random.normal(k_fake, (2, 3, 16, 16), jnp.float32)
    real = jax.random.normal(k_real, (2, 3, 16, 16), jnp.float32)
    params = init_discriminator_params(k_params, n_colors=3, patch_size=16)

    fwd = jax.jit(functools.partial(adversarial_forward, gan_type="GAN", gan_k=1))
    loss_g, loss_d = fwd(fake, real, params)
    jax.block_until_ready((loss_g, loss_d))

    ref_g, ref_d = _reference(fake, real, params)
    assert jnp.isfinite(loss_g) and jnp.isfinite(loss_d)
    assert jnp.allclose(loss_g, ref_g, atol=5e-2, rtol=5e-2), (loss_g, ref_g)
    assert jnp.allclose(loss_d, ref_d, atol=5e-2, rtol=5e-2), (loss_d, ref_d)

    print("KERNEL_OK")
</pallas_src>

<mosaic_0001>
module attributes {stable_mosaic.version = 11 : i64} {
  func.func @_fused_disc_loss_kernel(%arg0: memref<64x48xbf16, #tpu.memory_space<vmem>>, %arg1: memref<3x48x128xbf16, #tpu.memory_space<vmem>>, %arg2: memref<3x64x64xbf16, #tpu.memory_space<vmem>>, %arg3: memref<1x128xf32, #tpu.memory_space<vmem>>, %arg4: memref<3x128x128xbf16, #tpu.memory_space<vmem>>, %arg5: memref<3x32x64xbf16, #tpu.memory_space<vmem>>, %arg6: memref<1x128xf32, #tpu.memory_space<vmem>>, %arg7: memref<3x128x64xbf16, #tpu.memory_space<vmem>>, %arg8: memref<3x16x32xbf16, #tpu.memory_space<vmem>>, %arg9: memref<1x64xf32, #tpu.memory_space<vmem>>, %arg10: memref<4x4x16xbf16, #tpu.memory_space<vmem>>, %arg11: memref<4x64x32xbf16, #tpu.memory_space<vmem>>, %arg12: memref<1x32xf32, #tpu.memory_space<vmem>>, %arg13: memref<32x1xbf16, #tpu.memory_space<vmem>>, %arg14: memref<1x1xf32, #tpu.memory_space<vmem>>, %arg15: memref<2xf32, #tpu.memory_space<smem>>) attributes {dimension_semantics = [], scalar_prefetch = 0 : i64, scratch_operands = 0 : i64, tpu.core_type = #tpu.core_type<tc>} {
    %c0 = arith.constant 0 : index
    %c0_0 = arith.constant 0 : index
    %0 = vector.load %arg0[%c0, %c0_0] : memref<64x48xbf16, #tpu.memory_space<vmem>>, vector<64x48xbf16>
    %cst = arith.constant 0.000000e+00 : f32
    %1 = vector.broadcast %cst : f32 to vector<64x128xf32>
    %c0_1 = arith.constant 0 : index
    %c0_2 = arith.constant 0 : index
    %c0_3 = arith.constant 0 : index
    %2 = vector.load %arg2[%c0_1, %c0_2, %c0_3] : memref<3x64x64xbf16, #tpu.memory_space<vmem>>, vector<1x64x64xbf16>
    %3 = vector.shape_cast %2 : vector<1x64x64xbf16> to vector<64x64xbf16>
    %cst_4 = arith.constant dense<0.000000e+00> : vector<64x48xf32>
    %4 = tpu.matmul %3, %0, %cst_4 {dimension_numbers = #tpu.dot_dimension_numbers<[1], [0], [0], [1], [0, 0, 1, 1], [], []>} : vector<64x64xbf16>, vector<64x48xbf16>, vector<64x48xf32> -> vector<64x48xf32>
    %5 = arith.truncf %4 : vector<64x48xf32> to vector<64x48xbf16>
    %c0_5 = arith.constant 0 : index
    %c0_6 = arith.constant 0 : index
    %c0_7 = arith.constant 0 : index
    %6 = vector.load %arg1[%c0_5, %c0_6, %c0_7] : memref<3x48x128xbf16, #tpu.memory_space<vmem>>, vector<1x48x128xbf16>
    %7 = vector.shape_cast %6 : vector<1x48x128xbf16> to vector<48x128xbf16>
    %cst_8 = arith.constant dense<0.000000e+00> : vector<64x128xf32>
    %8 = tpu.matmul %5, %7, %cst_8 {dimension_numbers = #tpu.dot_dimension_numbers<[1], [0], [0], [1], [0, 0, 1, 1], [], []>} : vector<64x48xbf16>, vector<48x128xbf16>, vector<64x128xf32> -> vector<64x128xf32>
    %9 = arith.addf %1, %8 : vector<64x128xf32>
    %c1 = arith.constant 1 : index
    %c0_9 = arith.constant 0 : index
    %c0_10 = arith.constant 0 : index
    %10 = vector.load %arg2[%c1, %c0_9, %c0_10] : memref<3x64x64xbf16, #tpu.memory_space<vmem>>, vector<1x64x64xbf16>
    %11 = vector.shape_cast %10 : vector<1x64x64xbf16> to vector<64x64xbf16>
    %cst_11 = arith.constant dense<0.000000e+00> : vector<64x48xf32>
    %12 = tpu.matmul %11, %0, %cst_11 {dimension_numbers = #tpu.dot_dimension_numbers<[1], [0], [0], [1], [0, 0, 1, 1], [], []>} : vector<64x64xbf16>, vector<64x48xbf16>, vector<64x48xf32> -> vector<64x48xf32>
    %13 = arith.truncf %12 : vector<64x48xf32> to vector<64x48xbf16>
    %c1_12 = arith.constant 1 : index
    %c0_13 = arith.constant 0 : index
    %c0_14 = arith.constant 0 : index
    %14 = vector.load %arg1[%c1_12, %c0_13, %c0_14] : memref<3x48x128xbf16, #tpu.memory_space<vmem>>, vector<1x48x128xbf16>
    %15 = vector.shape_cast %14 : vector<1x48x128xbf16> to vector<48x128xbf16>
    %cst_15 = arith.constant dense<0.000000e+00> : vector<64x128xf32>
    %16 = tpu.matmul %13, %15, %cst_15 {dimension_numbers = #tpu.dot_dimension_numbers<[1], [0], [0], [1], [0, 0, 1, 1], [], []>} : vector<64x48xbf16>, vector<48x128xbf16>, vector<64x128xf32> -> vector<64x128xf32>
    %17 = arith.addf %9, %16 : vector<64x128xf32>
    %c2 = arith.constant 2 : index
    %c0_16 = arith.constant 0 : index
    %c0_17 = arith.constant 0 : index
    %18 = vector.load %arg2[%c2, %c0_16, %c0_17] : memref<3x64x64xbf16, #tpu.memory_space<vmem>>, vector<1x64x64xbf16>
    %19 = vector.shape_cast %18 : vector<1x64x64xbf16> to vector<64x64xbf16>
    %cst_18 = arith.constant dense<0.000000e+00> : vector<64x48xf32>
    %20 = tpu.matmul %19, %0, %cst_18 {dimension_numbers = #tpu.dot_dimension_numbers<[1], [0], [0], [1], [0, 0, 1, 1], [], []>} : vector<64x64xbf16>, vector<64x48xbf16>, vector<64x48xf32> -> vector<64x48xf32>
    %21 = arith.truncf %20 : vector<64x48xf32> to vector<64x48xbf16>
    %c2_19 = arith.constant 2 : index
    %c0_20 = arith.constant 0 : index
    %c0_21 = arith.constant 0 : index
    %22 = vector.load %arg1[%c2_19, %c0_20, %c0_21] : memref<3x48x128xbf16, #tpu.memory_space<vmem>>, vector<1x48x128xbf16>
    %23 = vector.shape_cast %22 : vector<1x48x128xbf16> to vector<48x128xbf16>
    %cst_22 = arith.constant dense<0.000000e+00> : vector<64x128xf32>
    %24 = tpu.matmul %21, %23, %cst_22 {dimension_numbers = #tpu.dot_dimension_numbers<[1], [0], [0], [1], [0, 0, 1, 1], [], []>} : vector<64x48xbf16>, vector<48x128xbf16>, vector<64x128xf32> -> vector<64x128xf32>
    %25 = arith.addf %17, %24 : vector<64x128xf32>
    %c0_23 = arith.constant 0 : index
    %c0_24 = arith.constant 0 : index
    %26 = vector.load %arg3[%c0_23, %c0_24] : memref<1x128xf32, #tpu.memory_space<vmem>>, vector<1x128xf32>
    %27 = vector.broadcast %26 : vector<1x128xf32> to vector<64x128xf32>
    %28 = arith.addf %25, %27 : vector<64x128xf32>
    %cst_25 = arith.constant 0.000000e+00 : f32
    %29 = vector.broadcast %cst_25 : f32 to vector<64x128xf32>
    %30 = arith.cmpf oge, %28, %29 : vector<64x128xf32>
    %cst_26 = arith.constant 2.000000e-01 : f32
    %31 = vector.broadcast %cst_26 : f32 to vector<64x128xf32>
    %32 = arith.mulf %31, %28 : vector<64x128xf32>
    %33 = arith.select %30, %28, %32 : vector<64x128xi1>, vector<64x128xf32>
    %34 = arith.truncf %33 : vector<64x128xf32> to vector<64x128xbf16>
    %cst_27 = arith.constant 0.000000e+00 : f32
    %35 = vector.broadcast %cst_27 : f32 to vector<32x128xf32>
    %c0_28 = arith.constant 0 : index
    %c0_29 = arith.constant 0 : index
    %c0_30 = arith.constant 0 : index
    %36 = vector.load %arg5[%c0_28, %c0_29, %c0_30] : memref<3x32x64xbf16, #tpu.memory_space<vmem>>, vector<1x32x64xbf16>
    %37 = vector.shape_cast %36 : vector<1x32x64xbf16> to vector<32x64xbf16>
    %cst_31 = arith.constant dense<0.000000e+00> : vector<32x128xf32>
    %38 = tpu.matmul %37, %34, %cst_31 {dimension_numbers = #tpu.dot_dimension_numbers<[1], [0], [0], [1], [0, 0, 1, 1], [], []>} : vector<32x64xbf16>, vector<64x128xbf16>, vector<32x128xf32> -> vector<32x128xf32>
    %39 = arith.truncf %38 : vector<32x128xf32> to vector<32x128xbf16>
    %c0_32 = arith.constant 0 : index
    %c0_33 = arith.constant 0 : index
    %c0_34 = arith.constant 0 : index
    %40 = vector.load %arg4[%c0_32, %c0_33, %c0_34] : memref<3x128x128xbf16, #tpu.memory_space<vmem>>, vector<1x128x128xbf16>
    %41 = vector.shape_cast %40 : vector<1x128x128xbf16> to vector<128x128xbf16>
    %cst_35 = arith.constant dense<0.000000e+00> : vector<32x128xf32>
    %42 = tpu.matmul %39, %41, %cst_35 {dimension_numbers = #tpu.dot_dimension_numbers<[1], [0], [0], [1], [0, 0, 1, 1], [], []>} : vector<32x128xbf16>, vector<128x128xbf16>, vector<32x128xf32> -> vector<32x128xf32>
    %43 = arith.addf %35, %42 : vector<32x128xf32>
    %c1_36 = arith.constant 1 : index
    %c0_37 = arith.constant 0 : index
    %c0_38 = arith.constant 0 : index
    %44 = vector.load %arg5[%c1_36, %c0_37, %c0_38] : memref<3x32x64xbf16, #tpu.memory_space<vmem>>, vector<1x32x64xbf16>
    %45 = vector.shape_cast %44 : vector<1x32x64xbf16> to vector<32x64xbf16>
    %cst_39 = arith.constant dense<0.000000e+00> : vector<32x128xf32>
    %46 = tpu.matmul %45, %34, %cst_39 {dimension_numbers = #tpu.dot_dimension_numbers<[1], [0], [0], [1], [0, 0, 1, 1], [], []>} : vector<32x64xbf16>, vector<64x128xbf16>, vector<32x128xf32> -> vector<32x128xf32>
    %47 = arith.truncf %46 : vector<32x128xf32> to vector<32x128xbf16>
    %c1_40 = arith.constant 1 : index
    %c0_41 = arith.constant 0 : index
    %c0_42 = arith.constant 0 : index
    %48 = vector.load %arg4[%c1_40, %c0_41, %c0_42] : memref<3x128x128xbf16, #tpu.memory_space<vmem>>, vector<1x128x128xbf16>
    %49 = vector.shape_cast %48 : vector<1x128x128xbf16> to vector<128x128xbf16>
    %cst_43 = arith.constant dense<0.000000e+00> : vector<32x128xf32>
    %50 = tpu.matmul %47, %49, %cst_43 {dimension_numbers = #tpu.dot_dimension_numbers<[1], [0], [0], [1], [0, 0, 1, 1], [], []>} : vector<32x128xbf16>, vector<128x128xbf16>, vector<32x128xf32> -> vector<32x128xf32>
    %51 = arith.addf %43, %50 : vector<32x128xf32>
    %c2_44 = arith.constant 2 : index
    %c0_45 = arith.constant 0 : index
    %c0_46 = arith.constant 0 : index
    %52 = vector.load %arg5[%c2_44, %c0_45, %c0_46] : memref<3x32x64xbf16, #tpu.memory_space<vmem>>, vector<1x32x64xbf16>
    %53 = vector.shape_cast %52 : vector<1x32x64xbf16> to vector<32x64xbf16>
    %cst_47 = arith.constant dense<0.000000e+00> : vector<32x128xf32>
    %54 = tpu.matmul %53, %34, %cst_47 {dimension_numbers = #tpu.dot_dimension_numbers<[1], [0], [0], [1], [0, 0, 1, 1], [], []>} : vector<32x64xbf16>, vector<64x128xbf16>, vector<32x128xf32> -> vector<32x128xf32>
    %55 = arith.truncf %54 : vector<32x128xf32> to vector<32x128xbf16>
    %c2_48 = arith.constant 2 : index
    %c0_49 = arith.constant 0 : index
    %c0_50 = arith.constant 0 : index
    %56 = vector.load %arg4[%c2_48, %c0_49, %c0_50] : memref<3x128x128xbf16, #tpu.memory_space<vmem>>, vector<1x128x128xbf16>
    %57 = vector.shape_cast %56 : vector<1x128x128xbf16> to vector<128x128xbf16>
    %cst_51 = arith.constant dense<0.000000e+00> : vector<32x128xf32>
    %58 = tpu.matmul %55, %57, %cst_51 {dimension_numbers = #tpu.dot_dimension_numbers<[1], [0], [0], [1], [0, 0, 1, 1], [], []>} : vector<32x128xbf16>, vector<128x128xbf16>, vector<32x128xf32> -> vector<32x128xf32>
    %59 = arith.addf %51, %58 : vector<32x128xf32>
    %c0_52 = arith.constant 0 : index
    %c0_53 = arith.constant 0 : index
    %60 = vector.load %arg6[%c0_52, %c0_53] : memref<1x128xf32, #tpu.memory_space<vmem>>, vector<1x128xf32>
    %61 = vector.broadcast %60 : vector<1x128xf32> to vector<32x128xf32>
    %62 = arith.addf %59, %61 : vector<32x128xf32>
    %cst_54 = arith.constant 0.000000e+00 : f32
    %63 = vector.broadcast %cst_54 : f32 to vector<32x128xf32>
    %64 = arith.cmpf oge, %62, %63 : vector<32x128xf32>
    %cst_55 = arith.constant 2.000000e-01 : f32
    %65 = vector.broadcast %cst_55 : f32 to vector<32x128xf32>
    %66 = arith.mulf %65, %62 : vector<32x128xf32>
    %67 = arith.select %64, %62, %66 : vector<32x128xi1>, vector<32x128xf32>
    %68 = arith.truncf %67 : vector<32x128xf32> to vector<32x128xbf16>
    %cst_56 = arith.constant 0.000000e+00 : f32
    %69 = vector.broadcast %cst_56 : f32 to vector<16x64xf32>
    %c0_57 = arith.constant 0 : index
    %c0_58 = arith.constant 0 : index
    %c0_59 = arith.constant 0 : index
    %70 = vector.load %arg8[%c0_57, %c0_58, %c0_59] : memref<3x16x32xbf16, #tpu.memory_space<vmem>>, vector<1x16x32xbf16>
    %71 = vector.shape_cast %70 : vector<1x16x32xbf16> to vector<16x32xbf16>
    %cst_60 = arith.constant dense<0.000000e+00> : vector<16x128xf32>
    %72 = tpu.matmul %71, %68, %cst_60 {dimension_numbers = #tpu.dot_dimension_numbers<[1], [0], [0], [1], [0, 0, 1, 1], [], []>} : vector<16x32xbf16>, vector<32x128xbf16>, vector<16x128xf32> -> vector<16x128xf32>
    %73 = arith.truncf %72 : vector<16x128xf32> to vector<16x128xbf16>
    %c0_61 = arith.constant 0 : index
    %c0_62 = arith.constant 0 : index
    %c0_63 = arith.constant 0 : index
    %74 = vector.load %arg7[%c0_61, %c0_62, %c0_63] : memref<3x128x64xbf16, #tpu.memory_space<vmem>>, vector<1x128x64xbf16>
    %75 = vector.shape_cast %74 : vector<1x128x64xbf16> to vector<128x64xbf16>
    %cst_64 = arith.constant dense<0.000000e+00> : vector<16x64xf32>
    %76 = tpu.matmul %73, %75, %cst_64 {dimension_numbers = #tpu.dot_dimension_numbers<[1], [0], [0], [1], [0, 0, 1, 1], [], []>} : vector<16x128xbf16>, vector<128x64xbf16>, vector<16x64xf32> -> vector<16x64xf32>
    %77 = arith.addf %69, %76 : vector<16x64xf32>
    %c1_65 = arith.constant 1 : index
    %c0_66 = arith.constant 0 : index
    %c0_67 = arith.constant 0 : index
    %78 = vector.load %arg8[%c1_65, %c0_66, %c0_67] : memref<3x16x32xbf16, #tpu.memory_space<vmem>>, vector<1x16x32xbf16>
    %79 = vector.shape_cast %78 : vector<1x16x32xbf16> to vector<16x32xbf16>
    %cst_68 = arith.constant dense<0.000000e+00> : vector<16x128xf32>
    %80 = tpu.matmul %79, %68, %cst_68 {dimension_numbers = #tpu.dot_dimension_numbers<[1], [0], [0], [1], [0, 0, 1, 1], [], []>} : vector<16x32xbf16>, vector<32x128xbf16>, vector<16x128xf32> -> vector<16x128xf32>
    %81 = arith.truncf %80 : vector<16x128xf32> to vector<16x128xbf16>
    %c1_69 = arith.constant 1 : index
    %c0_70 = arith.constant 0 : index
    %c0_71 = arith.constant 0 : index
    %82 = vector.load %arg7[%c1_69, %c0_70, %c0_71] : memref<3x128x64xbf16, #tpu.memory_space<vmem>>, vector<1x128x64xbf16>
    %83 = vector.shape_cast %82 : vector<1x128x64xbf16> to vector<128x64xbf16>
    %cst_72 = arith.constant dense<0.000000e+00> : vector<16x64xf32>
    %84 = tpu.matmul %81, %83, %cst_72 {dimension_numbers = #tpu.dot_dimension_numbers<[1], [0], [0], [1], [0, 0, 1, 1], [], []>} : vector<16x128xbf16>, vector<128x64xbf16>, vector<16x64xf32> -> vector<16x64xf32>
    %85 = arith.addf %77, %84 : vector<16x64xf32>
    %c2_73 = arith.constant 2 : index
    %c0_74 = arith.constant 0 : index
    %c0_75 = arith.constant 0 : index
    %86 = vector.load %arg8[%c2_73, %c0_74, %c0_75] : memref<3x16x32xbf16, #tpu.memory_space<vmem>>, vector<1x16x32xbf16>
    %87 = vector.shape_cast %86 : vector<1x16x32xbf16> to vector<16x32xbf16>
    %cst_76 = arith.constant dense<0.000000e+00> : vector<16x128xf32>
    %88 = tpu.matmul %87, %68, %cst_76 {dimension_numbers = #tpu.dot_dimension_numbers<[1], [0], [0], [1], [0, 0, 1, 1], [], []>} : vector<16x32xbf16>, vector<32x128xbf16>, vector<16x128xf32> -> vector<16x128xf32>
    %89 = arith.truncf %88 : vector<16x128xf32> to vector<16x128xbf16>
    %c2_77 = arith.constant 2 : index
    %c0_78 = arith.constant 0 : index
    %c0_79 = arith.constant 0 : index
    %90 = vector.load %arg7[%c2_77, %c0_78, %c0_79] : memref<3x128x64xbf16, #tpu.memory_space<vmem>>, vector<1x128x64xbf16>
    %91 = vector.shape_cast %90 : vector<1x128x64xbf16> to vector<128x64xbf16>
    %cst_80 = arith.constant dense<0.000000e+00> : vector<16x64xf32>
    %92 = tpu.matmul %89, %91, %cst_80 {dimension_numbers = #tpu.dot_dimension_numbers<[1], [0], [0], [1], [0, 0, 1, 1], [], []>} : vector<16x128xbf16>, vector<128x64xbf16>, vector<16x64xf32> -> vector<16x64xf32>
    %93 = arith.addf %85, %92 : vector<16x64xf32>
    %c0_81 = arith.constant 0 : index
    %c0_82 = arith.constant 0 : index
    %94 = vector.load %arg9[%c0_81, %c0_82] : memref<1x64xf32, #tpu.memory_space<vmem>>, vector<1x64xf32>
    %95 = vector.broadcast %94 : vector<1x64xf32> to vector<16x64xf32>
    %96 = arith.addf %93, %95 : vector<16x64xf32>
    %cst_83 = arith.constant 0.000000e+00 : f32
    %97 = vector.broadcast %cst_83 : f32 to vector<16x64xf32>
    %98 = arith.cmpf oge, %96, %97 : vector<16x64xf32>
    %cst_84 = arith.constant 2.000000e-01 : f32
    %99 = vector.broadcast %cst_84 : f32 to vector<16x64xf32>
    %100 = arith.mulf %99, %96 : vector<16x64xf32>
    %101 = arith.select %98, %96, %100 : vector<16x64xi1>, vector<16x64xf32>
    %102 = arith.truncf %101 : vector<16x64xf32> to vector<16x64xbf16>
    %cst_85 = arith.constant 0.000000e+00 : f32
    %103 = vector.broadcast %cst_85 : f32 to vector<4x32xf32>
    %c0_86 = arith.constant 0 : index
    %c0_87 = arith.constant 0 : index
    %c0_88 = arith.constant 0 : index
    %104 = vector.load %arg10[%c0_86, %c0_87, %c0_88] : memref<4x4x16xbf16, #tpu.memory_space<vmem>>, vector<1x4x16xbf16>
    %105 = vector.shape_cast %104 : vector<1x4x16xbf16> to vector<4x16xbf16>
    %cst_89 = arith.constant dense<0.000000e+00> : vector<4x64xf32>
    %106 = tpu.matmul %105, %102, %cst_89 {dimension_numbers = #tpu.dot_dimension_numbers<[1], [0], [0], [1], [0, 0, 1, 1], [], []>} : vector<4x16xbf16>, vector<16x64xbf16>, vector<4x64xf32> -> vector<4x64xf32>
    %107 = arith.truncf %106 : vector<4x64xf32> to vector<4x64xbf16>
    %c0_90 = arith.constant 0 : index
    %c0_91 = arith.constant 0 : index
    %c0_92 = arith.constant 0 : index
    %108 = vector.load %arg11[%c0_90, %c0_91, %c0_92] : memref<4x64x32xbf16, #tpu.memory_space<vmem>>, vector<1x64x32xbf16>
    %109 = vector.shape_cast %108 : vector<1x64x32xbf16> to vector<64x32xbf16>
    %cst_93 = arith.constant dense<0.000000e+00> : vector<4x32xf32>
    %110 = tpu.matmul %107, %109, %cst_93 {dimension_numbers = #tpu.dot_dimension_numbers<[1], [0], [0], [1], [0, 0, 1, 1], [], []>} : vector<4x64xbf16>, vector<64x32xbf16>, vector<4x32xf32> -> vector<4x32xf32>
    %111 = arith.addf %103, %110 : vector<4x32xf32>
    %c1_94 = arith.constant 1 : index
    %c0_95 = arith.constant 0 : index
    %c0_96 = arith.constant 0 : index
    %112 = vector.load %arg10[%c1_94, %c0_95, %c0_96] : memref<4x4x16xbf16, #tpu.memory_space<vmem>>, vector<1x4x16xbf16>
    %113 = vector.shape_cast %112 : vector<1x4x16xbf16> to vector<4x16xbf16>
    %cst_97 = arith.constant dense<0.000000e+00> : vector<4x64xf32>
    %114 = tpu.matmul %113, %102, %cst_97 {dimension_numbers = #tpu.dot_dimension_numbers<[1], [0], [0], [1], [0, 0, 1, 1], [], []>} : vector<4x16xbf16>, vector<16x64xbf16>, vector<4x64xf32> -> vector<4x64xf32>
    %115 = arith.truncf %114 : vector<4x64xf32> to vector<4x64xbf16>
    %c1_98 = arith.constant 1 : index
    %c0_99 = arith.constant 0 : index
    %c0_100 = arith.constant 0 : index
    %116 = vector.load %arg11[%c1_98, %c0_99, %c0_100] : memref<4x64x32xbf16, #tpu.memory_space<vmem>>, vector<1x64x32xbf16>
    %117 = vector.shape_cast %116 : vector<1x64x32xbf16> to vector<64x32xbf16>
    %cst_101 = arith.constant dense<0.000000e+00> : vector<4x32xf32>
    %118 = tpu.matmul %115, %117, %cst_101 {dimension_numbers = #tpu.dot_dimension_numbers<[1], [0], [0], [1], [0, 0, 1, 1], [], []>} : vector<4x64xbf16>, vector<64x32xbf16>, vector<4x32xf32> -> vector<4x32xf32>
    %119 = arith.addf %111, %118 : vector<4x32xf32>
    %c2_102 = arith.constant 2 : index
    %c0_103 = arith.constant 0 : index
    %c0_104 = arith.constant 0 : index
    %120 = vector.load %arg10[%c2_102, %c0_103, %c0_104] : memref<4x4x16xbf16, #tpu.memory_space<vmem>>, vector<1x4x16xbf16>
    %121 = vector.shape_cast %120 : vector<1x4x16xbf16> to vector<4x16xbf16>
    %cst_105 = arith.constant dense<0.000000e+00> : vector<4x64xf32>
    %122 = tpu.matmul %121, %102, %cst_105 {dimension_numbers = #tpu.dot_dimension_numbers<[1], [0], [0], [1], [0, 0, 1, 1], [], []>} : vector<4x16xbf16>, vector<16x64xbf16>, vector<4x64xf32> -> vector<4x64xf32>
    %123 = arith.truncf %122 : vector<4x64xf32> to vector<4x64xbf16>
    %c2_106 = arith.constant 2 : index
    %c0_107 = arith.constant 0 : index
    %c0_108 = arith.constant 0 : index
    %124 = vector.load %arg11[%c2_106, %c0_107, %c0_108] : memref<4x64x32xbf16, #tpu.memory_space<vmem>>, vector<1x64x32xbf16>
    %125 = vector.shape_cast %124 : vector<1x64x32xbf16> to vector<64x32xbf16>
    %cst_109 = arith.constant dense<0.000000e+00> : vector<4x32xf32>
    %126 = tpu.matmul %123, %125, %cst_109 {dimension_numbers = #tpu.dot_dimension_numbers<[1], [0], [0], [1], [0, 0, 1, 1], [], []>} : vector<4x64xbf16>, vector<64x32xbf16>, vector<4x32xf32> -> vector<4x32xf32>
    %127 = arith.addf %119, %126 : vector<4x32xf32>
    %c3 = arith.constant 3 : index
    %c0_110 = arith.constant 0 : index
    %c0_111 = arith.constant 0 : index
    %128 = vector.load %arg10[%c3, %c0_110, %c0_111] : memref<4x4x16xbf16, #tpu.memory_space<vmem>>, vector<1x4x16xbf16>
    %129 = vector.shape_cast %128 : vector<1x4x16xbf16> to vector<4x16xbf16>
    %cst_112 = arith.constant dense<0.000000e+00> : vector<4x64xf32>
    %130 = tpu.matmul %129, %102, %cst_112 {dimension_numbers = #tpu.dot_dimension_numbers<[1], [0], [0], [1], [0, 0, 1, 1], [], []>} : vector<4x16xbf16>, vector<16x64xbf16>, vector<4x64xf32> -> vector<4x64xf32>
    %131 = arith.truncf %130 : vector<4x64xf32> to vector<4x64xbf16>
    %c3_113 = arith.constant 3 : index
    %c0_114 = arith.constant 0 : index
    %c0_115 = arith.constant 0 : index
    %132 = vector.load %arg11[%c3_113, %c0_114, %c0_115] : memref<4x64x32xbf16, #tpu.memory_space<vmem>>, vector<1x64x32xbf16>
    %133 = vector.shape_cast %132 : vector<1x64x32xbf16> to vector<64x32xbf16>
    %cst_116 = arith.constant dense<0.000000e+00> : vector<4x32xf32>
    %134 = tpu.matmul %131, %133, %cst_116 {dimension_numbers = #tpu.dot_dimension_numbers<[1], [0], [0], [1], [0, 0, 1, 1], [], []>} : vector<4x64xbf16>, vector<64x32xbf16>, vector<4x32xf32> -> vector<4x32xf32>
    %135 = arith.addf %127, %134 : vector<4x32xf32>
    %c0_117 = arith.constant 0 : index
    %c0_118 = arith.constant 0 : index
    %136 = vector.load %arg12[%c0_117, %c0_118] : memref<1x32xf32, #tpu.memory_space<vmem>>, vector<1x32xf32>
    %137 = vector.broadcast %136 : vector<1x32xf32> to vector<4x32xf32>
    %138 = arith.addf %135, %137 : vector<4x32xf32>
    %cst_119 = arith.constant 0.000000e+00 : f32
    %139 = vector.broadcast %cst_119 : f32 to vector<4x32xf32>
    %140 = arith.cmpf oge, %138, %139 : vector<4x32xf32>
    %cst_120 = arith.constant 2.000000e-01 : f32
    %141 = vector.broadcast %cst_120 : f32 to vector<4x32xf32>
    %142 = arith.mulf %141, %138 : vector<4x32xf32>
    %143 = arith.select %140, %138, %142 : vector<4x32xi1>, vector<4x32xf32>
    %144 = arith.truncf %143 : vector<4x32xf32> to vector<4x32xbf16>
    %c0_121 = arith.constant 0 : index
    %c0_122 = arith.constant 0 : index
    %145 = vector.load %arg13[%c0_121, %c0_122] : memref<32x1xbf16, #tpu.memory_space<vmem>>, vector<32x1xbf16>
    %cst_123 = arith.constant dense<0.000000e+00> : vector<4x1xf32>
    %146 = tpu.matmul %144, %145, %cst_123 {dimension_numbers = #tpu.dot_dimension_numbers<[1], [0], [0], [1], [0, 0, 1, 1], [], []>} : vector<4x32xbf16>, vector<32x1xbf16>, vector<4x1xf32> -> vector<4x1xf32>
    %c0_124 = arith.constant 0 : index
    %c0_125 = arith.constant 0 : index
    %147 = vector.load %arg14[%c0_124, %c0_125] : memref<1x1xf32, #tpu.memory_space<vmem>>, vector<1x1xf32>
    %148 = vector.broadcast %147 : vector<1x1xf32> to vector<4x1xf32>
    %149 = arith.addf %146, %148 : vector<4x1xf32>
    %150 = vector.extract_strided_slice %149 {offsets = [0, 0], sizes = [2, 1], strides = [1, 1]} : vector<4x1xf32> to vector<2x1xf32>
    %151 = vector.extract_strided_slice %149 {offsets = [2, 0], sizes = [2, 1], strides = [1, 1]} : vector<4x1xf32> to vector<2x1xf32>
    %cst_126 = arith.constant 0.000000e+00 : f32
    %152 = vector.broadcast %cst_126 : f32 to vector<2x1xf32>
    %153 = arith.maximumf %150, %152 : vector<2x1xf32>
    %154 = math.absf %150 : vector<2x1xf32>
    %cst_127 = arith.constant 0.000000e+00 : f32
    %155 = vector.broadcast %cst_127 : f32 to vector<2x1xf32>
    %156 = arith.subf %155, %154 : vector<2x1xf32>
    %157 = math.exp %156 : vector<2x1xf32>
    %158 = math.log1p %157 : vector<2x1xf32>
    %159 = arith.addf %153, %158 : vector<2x1xf32>
    %160 = vector.shape_cast %159 : vector<2x1xf32> to vector<1x2x1xf32>
    %cst_128 = arith.constant dense<0.000000e+00> : vector<1xf32>
    %161 = vector.multi_reduction <add>, %160, %cst_128 [1, 2] : vector<1x2x1xf32> to vector<1xf32>
    %162 = vector.shape_cast %161 : vector<1xf32> to vector<1x1x1xf32>
    %163 = vector.extract %162[0, 0, 0] : f32 from vector<1x1x1xf32>
    %cst_129 = arith.constant 2.000000e+00 : f32
    %164 = arith.divf %163, %cst_129 : f32
    %cst_130 = arith.constant 0.000000e+00 : f32
    %165 = vector.broadcast %cst_130 : f32 to vector<2x1xf32>
    %166 = arith.subf %165, %151 : vector<2x1xf32>
    %cst_131 = arith.constant 0.000000e+00 : f32
    %167 = vector.broadcast %cst_131 : f32 to vector<2x1xf32>
    %168 = arith.maximumf %166, %167 : vector<2x1xf32>
    %169 = math.absf %166 : vector<2x1xf32>
    %cst_132 = arith.constant 0.000000e+00 : f32
    %170 = vector.broadcast %cst_132 : f32 to vector<2x1xf32>
    %171 = arith.subf %170, %169 : vector<2x1xf32>
    %172 = math.exp %171 : vector<2x1xf32>
    %173 = math.log1p %172 : vector<2x1xf32>
    %174 = arith.addf %168, %173 : vector<2x1xf32>
    %175 = vector.shape_cast %174 : vector<2x1xf32> to vector<1x2x1xf32>
    %cst_133 = arith.constant dense<0.000000e+00> : vector<1xf32>
    %176 = vector.multi_reduction <add>, %175, %cst_133 [1, 2] : vector<1x2x1xf32> to vector<1xf32>
    %177 = vector.shape_cast %176 : vector<1xf32> to vector<1x1x1xf32>
    %178 = vector.extract %177[0, 0, 0] : f32 from vector<1x1x1xf32>
    %cst_134 = arith.constant 2.000000e+00 : f32
    %179 = arith.divf %178, %cst_134 : f32
    %180 = arith.addf %164, %179 : f32
    %c0_135 = arith.constant 0 : index
    %181 = memref.load %arg15[%c0_135] : memref<2xf32, #tpu.memory_space<smem>>
    memref.store %180, %arg15[%c0_135] : memref<2xf32, #tpu.memory_space<smem>>
    %cst_136 = arith.constant 0.000000e+00 : f32
    %182 = vector.broadcast %cst_136 : f32 to vector<2x1xf32>
    %183 = arith.subf %182, %150 : vector<2x1xf32>
    %cst_137 = arith.constant 0.000000e+00 : f32
    %184 = vector.broadcast %cst_137 : f32 to vector<2x1xf32>
    %185 = arith.maximumf %183, %184 : vector<2x1xf32>
    %186 = math.absf %183 : vector<2x1xf32>
    %cst_138 = arith.constant 0.000000e+00 : f32
    %187 = vector.broadcast %cst_138 : f32 to vector<2x1xf32>
    %188 = arith.subf %187, %186 : vector<2x1xf32>
    %189 = math.exp %188 : vector<2x1xf32>
    %190 = math.log1p %189 : vector<2x1xf32>
    %191 = arith.addf %185, %190 : vector<2x1xf32>
    %192 = vector.shape_cast %191 : vector<2x1xf32> to vector<1x2x1xf32>
    %cst_139 = arith.constant dense<0.000000e+00> : vector<1xf32>
    %193 = vector.multi_reduction <add>, %192, %cst_139 [1, 2] : vector<1x2x1xf32> to vector<1xf32>
    %194 = vector.shape_cast %193 : vector<1xf32> to vector<1x1x1xf32>
    %195 = vector.extract %194[0, 0, 0] : f32 from vector<1x1x1xf32>
    %cst_140 = arith.constant 2.000000e+00 : f32
    %196 = arith.divf %195, %cst_140 : f32
    %c1_141 = arith.constant 1 : index
    %197 = memref.load %arg15[%c1_141] : memref<2xf32, #tpu.memory_space<smem>>
    memref.store %196, %arg15[%c1_141] : memref<2xf32, #tpu.memory_space<smem>>
    return
  }
}

</mosaic_0001>

<llo_original>
// kernel: tile.18
$region0: #{tile.18}
  #allocation0 [shape = 's32[1]{0}', space=sflag, size = 0x4, scoped, tag = 'scoped memory for tile.18']
  %s0 = inlined_call_operand.vmem [shape: f32[8], index: 0, kind: input, shape index: {}]
  %s1 = inlined_call_operand.vmem [shape: f32[16,8], index: 1, kind: output, shape index: {}]
  // Predicated region
  $region2: #{tile.18} parent=0 // pred_check
    _
  $region3: #{tile.18} parent=0 // pred_check_branch
    %3 = sbr.rel (0) target = $region5
  $region4: #{tile.18} parent=0 // pred_region
    _
  $region5: #{tile.18} parent=0 // pred_fallthru
    _
  %v4 = vld [vmem:[%s0] ss:$0 sm:$0xff]
  %5 = vst [vmem:[%s1] sm:$0xff] %v4
  %s6 = scalar_lea.vmem %s1, 8
  %7 = vst [vmem:[%s6] sm:$0xff] %v4

// kernel: tile.19
$region0: #{tile.19}
  %s0 = inlined_call_operand.vmem [shape: f32[16,8], index: 0, kind: input, shape index: {}]
  %s1 = inlined_call_operand.vmem [shape: f32[1,128], index: 1, kind: output, shape index: {}]
  $region1: #{tile.19} parent=0
    #allocation0 [shape = 'u8[4096]{0}', space=vmem, size = 0x1000, scoped, tag = 'scoped mem for output reshape']
    %v2 = vld [vmem:[%s0] sm:$0x1]
    %vm3 = vcmask 64512
    %4 = vst.msk [vmem:[#allocation0] sm:$0x1] %vm3, %v2
    %s5 = scalar_lea.vmem %s0, 15
    %v6 = vld [vmem:[%s5] sm:$0x1]
    %7 = vrot.lane.b32.xlu0 %v6, 120
    %v8 = vpop.permute.xlu0 %7
    %vm9 = vcmask 1048512
    %10 = vst.msk [vmem:[#allocation0] sm:$0x1] %vm9, %v8
    %s11 = scalar_lea.vmem %s0, 14
    %v12 = vld [vmem:[%s11] sm:$0x1]
    %13 = vrot.lane.b32.xlu0 %v12, 112
    %v14 = vpop.permute.xlu0 %13
    %vm15 = vcmask 982912
    %16 = vst.msk [vmem:[#allocation0] sm:$0x1] %vm15, %v14
    %s17 = scalar_lea.vmem %s0, 13
    %v18 = vld [vmem:[%s17] sm:$0x1]
    %19 = vrot.lane.b32.xlu0 %v18, 104
    %v20 = vpop.permute.xlu0 %19
    %vm21 = vcmask 917312
    %22 = vst.msk [vmem:[#allocation0] sm:$0x1] %vm21, %v20
    %s23 = scalar_lea.vmem %s0, 12
    %v24 = vld [vmem:[%s23] sm:$0x1]
    %25 = vrot.lane.b32.xlu0 %v24, 96
    %v26 = vpop.permute.xlu0 %25
    %vm27 = vcmask 851712
    %28 = vst.msk [vmem:[#allocation0] sm:$0x1] %vm27, %v26
    %s29 = scalar_lea.vmem %s0, 11
    %v30 = vld [vmem:[%s29] sm:$0x1]
    %31 = vrot.lane.b32.xlu0 %v30, 88
    %v32 = vpop.permute.xlu0 %31
    %vm33 = vcmask 786112
    %34 = vst.msk [vmem:[#allocation0] sm:$0x1] %vm33, %v32
    %s35 = scalar_lea.vmem %s0, 10
    %v36 = vld [vmem:[%s35] sm:$0x1]
    %37 = vrot.lane.b32.xlu0 %v36, 80
    %v38 = vpop.permute.xlu0 %37
    %vm39 = vcmask 720512
    %40 = vst.msk [vmem:[#allocation0] sm:$0x1] %vm39, %v38
    %s41 = scalar_lea.vmem %s0, 9
    %v42 = vld [vmem:[%s41] sm:$0x1]
    %43 = vrot.lane.b32.xlu0 %v42, 72
    %v44 = vpop.permute.xlu0 %43
    %vm45 = vcmask 654912
    %46 = vst.msk [vmem:[#allocation0] sm:$0x1] %vm45, %v44
    %s47 = scalar_lea.vmem %s0, 8
    %v48 = vld [vmem:[%s47] sm:$0x1]
    %49 = vrot.lane.b32.xlu0 %v48, 64
    %v50 = vpop.permute.xlu0 %49
    %vm51 = vcmask 589312
    %52 = vst.msk [vmem:[#allocation0] sm:$0x1] %vm51, %v50
    %s53 = scalar_lea.vmem %s0, 7
    %v54 = vld [vmem:[%s53] sm:$0x1]
    %55 = vrot.lane.b32.xlu0 %v54, 56
    %v56 = vpop.permute.xlu0 %55
    %vm57 = vcmask 523712
    %58 = vst.msk [vmem:[#allocation0] sm:$0x1] %vm57, %v56
    %s59 = scalar_lea.vmem %s0, 6
    %v60 = vld [vmem:[%s59] sm:$0x1]
    %61 = vrot.lane.b32.xlu0 %v60, 48
    %v62 = vpop.permute.xlu0 %61
    %vm63 = vcmask 458112
    %64 = vst.msk [vmem:[#allocation0] sm:$0x1] %vm63, %v62
    %s65 = scalar_lea.vmem %s0, 5
    %v66 = vld [vmem:[%s65] sm:$0x1]
    %67 = vrot.lane.b32.xlu0 %v66, 40
    %v68 = vpop.permute.xlu0 %67
    %vm69 = vcmask 392512
    %70 = vst.msk [vmem:[#allocation0] sm:$0x1] %vm69, %v68
    %s71 = scalar_lea.vmem %s0, 4
    %v72 = vld [vmem:[%s71] sm:$0x1]
    %73 = vrot.lane.b32.xlu0 %v72, 32
    %v74 = vpop.permute.xlu0 %73
    %vm75 = vcmask 326912
    %76 = vst.msk [vmem:[#allocation0] sm:$0x1] %vm75, %v74
    %s77 = scalar_lea.vmem %s0, 3
    %v78 = vld [vmem:[%s77] sm:$0x1]
    %79 = vrot.lane.b32.xlu0 %v78, 24
    %v80 = vpop.permute.xlu0 %79
    %vm81 = vcmask 261312
    %82 = vst.msk [vmem:[#allocation0] sm:$0x1] %vm81, %v80
    %s83 = scalar_lea.vmem %s0, 2
    %v84 = vld [vmem:[%s83] sm:$0x1]
    %85 = vrot.lane.b32.xlu0 %v84, 16
    %v86 = vpop.permute.xlu0 %85
    %vm87 = vcmask 195712
    %88 = vst.msk [vmem:[#allocation0] sm:$0x1] %vm87, %v86
    %s89 = scalar_lea.vmem %s0, 1
    %v90 = vld [vmem:[%s89] sm:$0x1]
    %91 = vrot.lane.b32.xlu0 %v90, 8
    %v92 = vpop.permute.xlu0 %91
    %vm93 = vcmask 130112
    %94 = vst.msk [vmem:[#allocation0] sm:$0x1] %vm93, %v92
    %s96 = sshllo.u32 0, 1
    %v98 = vld [vmem:[#allocation0] sm:%s96]
    %s99 = sshllo.u32 0, 1
    %100 = vst [vmem:[%s1] sm:%s99] %v98

// kernel: tile.23
$region0: #{tile.23}
  #allocation0 [shape = 's32[1]{0}', space=sflag, size = 0x4, scoped, tag = 'scoped memory for tile.23']
  %s0 = inlined_call_operand.vmem [shape: f32[16], index: 0, kind: input, shape index: {}]
  %s1 = inlined_call_operand.vmem [shape: f32[8,16], index: 1, kind: output, shape index: {}]
  // Predicated region
  $region2: #{tile.23} parent=0 // pred_check
    _
  $region3: #{tile.23} parent=0 // pred_check_branch
    %3 = sbr.rel (0) target = $region5
  $region4: #{tile.23} parent=0 // pred_region
    _
  $region5: #{tile.23} parent=0 // pred_fallthru
    _
  %v4 = vld [vmem:[%s0] ss:$0 sm:$0xff]
  %5 = vst [vmem:[%s1] sm:$0xff] %v4

// kernel: tile.24
$region0: #{tile.24}
  %s0 = inlined_call_operand.vmem [shape: f32[8,16], index: 0, kind: input, shape index: {}]
  %s1 = inlined_call_operand.vmem [shape: f32[1,128], index: 1, kind: output, shape index: {}]
  $region1: #{tile.24} parent=0
    #allocation0 [shape = 'u8[4096]{0}', space=vmem, size = 0x1000, scoped, tag = 'scoped mem for output reshape']
    %v2 = vld [vmem:[%s0] sm:$0x1]
    %vm3 = vcmask 130048
    %4 = vst.msk [vmem:[#allocation0] sm:$0x1] %vm3, %v2
    %s5 = scalar_lea.vmem %s0, 7
    %v6 = vld [vmem:[%s5] sm:$0x1]
    %7 = vrot.lane.b32.xlu0 %v6, 112
    %v8 = vpop.permute.xlu0 %7
    %vm9 = vcmask 1048448
    %10 = vst.msk [vmem:[#allocation0] sm:$0x1] %vm9, %v8
    %s11 = scalar_lea.vmem %s0, 6
    %v12 = vld [vmem:[%s11] sm:$0x1]
    %13 = vrot.lane.b32.xlu0 %v12, 96
    %v14 = vpop.permute.xlu0 %13
    %vm15 = vcmask 917248
    %16 = vst.msk [vmem:[#allocation0] sm:$0x1] %vm15, %v14
    %s17 = scalar_lea.vmem %s0, 5
    %v18 = vld [vmem:[%s17] sm:$0x1]
    %19 = vrot.lane.b32.xlu0 %v18, 80
    %v20 = vpop.permute.xlu0 %19
    %vm21 = vcmask 786048
    %22 = vst.msk [vmem:[#allocation0] sm:$0x1] %vm21, %v20
    %s23 = scalar_lea.vmem %s0, 4
    %v24 = vld [vmem:[%s23] sm:$0x1]
    %25 = vrot.lane.b32.xlu0 %v24, 64
    %v26 = vpop.permute.xlu0 %25
    %vm27 = vcmask 654848
    %28 = vst.msk [vmem:[#allocation0] sm:$0x1] %vm27, %v26
    %s29 = scalar_lea.vmem %s0, 3
    %v30 = vld [vmem:[%s29] sm:$0x1]
    %31 = vrot.lane.b32.xlu0 %v30, 48
    %v32 = vpop.permute.xlu0 %31
    %vm33 = vcmask 523648
    %34 = vst.msk [vmem:[#allocation0] sm:$0x1] %vm33, %v32
    %s35 = scalar_lea.vmem %s0, 2
    %v36 = vld [vmem:[%s35] sm:$0x1]
    %37 = vrot.lane.b32.xlu0 %v36, 32
    %v38 = vpop.permute.xlu0 %37
    %vm39 = vcmask 392448
    %40 = vst.msk [vmem:[#allocation0] sm:$0x1] %vm39, %v38
    %s41 = scalar_lea.vmem %s0, 1
    %v42 = vld [vmem:[%s41] sm:$0x1]
    %43 = vrot.lane.b32.xlu0 %v42, 16
    %v44 = vpop.permute.xlu0 %43
    %vm45 = vcmask 261248
    %46 = vst.msk [vmem:[#allocation0] sm:$0x1] %vm45, %v44
    %s48 = sshllo.u32 0, 1
    %v50 = vld [vmem:[#allocation0] sm:%s48]
    %s51 = sshllo.u32 0, 1
    %52 = vst [vmem:[%s1] sm:%s51] %v50

// kernel: tile.28
$region0: #{tile.28}
  #allocation0 [shape = 's32[1]{0}', space=sflag, size = 0x4, scoped, tag = 'scoped memory for tile.28']
  %s0 = inlined_call_operand.vmem [shape: f32[16], index: 0, kind: input, shape index: {}]
  %s1 = inlined_call_operand.vmem [shape: f32[4,16], index: 1, kind: output, shape index: {}]
  // Predicated region
  $region2: #{tile.28} parent=0 // pred_check
    _
  $region3: #{tile.28} parent=0 // pred_check_branch
    %3 = sbr.rel (0) target = $region5
  $region4: #{tile.28} parent=0 // pred_region
    _
  $region5: #{tile.28} parent=0 // pred_fallthru
    _
  %v4 = vld [vmem:[%s0] ss:$0 sm:$0xff]
  %5 = vst [vmem:[%s1] sm:$0xf] %v4

// kernel: tile.29
$region0: #{tile.29}
  %s0 = inlined_call_operand.vmem [shape: f32[4,16], index: 0, kind: input, shape index: {}]
  %s1 = inlined_call_operand.vmem [shape: f32[1,64], index: 1, kind: output, shape index: {}]
  $region1: #{tile.29} parent=0
    #allocation0 [shape = 'u8[4096]{0}', space=vmem, size = 0x1000, scoped, tag = 'scoped mem for output reshape']
    #allocation1 [shape = 'u8[4096]{0}', space=vmem, size = 0x1000, scoped, tag = 'scoped mem for input reshape']
    %s3 = sshllo.u32 0, 4
    %v4 = vld [vmem:[%s0] sm:%s3]
    %5 = vst [vmem:[#allocation1] sm:%s3] %v4
    %v6 = vld [vmem:[#allocation1] sm:$0x1]
    %vm7 = vcmask 130048
    %8 = vst.msk [vmem:[#allocation0] sm:$0x1] %vm7, %v6
    %s9 = scalar_lea.vmem [#allocation1], 3
    %v10 = vld [vmem:[%s9] sm:$0x1]
    %11 = vrot.lane.b32.xlu0 %v10, 48
    %v12 = vpop.permute.xlu0 %11
    %vm13 = vcmask 523648
    %14 = vst.msk [vmem:[#allocation0] sm:$0x1] %vm13, %v12
    %s15 = scalar_lea.vmem [#allocation1], 2
    %v16 = vld [vmem:[%s15] sm:$0x1]
    %17 = vrot.lane.b32.xlu0 %v16, 32
    %v18 = vpop.permute.xlu0 %17
    %vm19 = vcmask 392448
    %20 = vst.msk [vmem:[#allocation0] sm:$0x1] %vm19, %v18
    %s21 = scalar_lea.vmem [#allocation1], 1
    %v22 = vld [vmem:[%s21] sm:$0x1]
    %23 = vrot.lane.b32.xlu0 %v22, 16
    %v24 = vpop.permute.xlu0 %23
    %vm25 = vcmask 261248
    %26 = vst.msk [vmem:[#allocation0] sm:$0x1] %vm25, %v24
    %s28 = sshllo.u32 0, 1
    %v30 = vld [vmem:[#allocation0] sm:%s28]
    %s31 = sshllo.u32 0, 1
    %32 = vst [vmem:[%s1] sm:%s31] %v30

// kernel: adversarial_forward.1
$region0: #{adversarial_forward.1}
  #allocation0 [shape = 'u32[]', space=smem, size = 0x4, offset = 0x4, fixed_abs, tag = 'smem constant byte address 0x4 - core index']
  #allocation1 [shape = 'u32[144,128]{1,0:T(1,128)}', space=vmem, size = 0x12000, scoped, tag = 'internal scratch']
  #allocation2 [shape = 'f32[1,1]{1,0:T(1,128)S(1)}', space=vmem, size = 0x200, scoped, tag = 'scoped memory for adversarial_forward.1']
  %s0 = inlined_call_operand.vmem [shape: bf16[64,48], index: 0, kind: input, shape index: {}]
  %s1 = inlined_call_operand.vmem [shape: bf16[3,48,128], index: 1, kind: input, shape index: {}]
  %s2 = inlined_call_operand.vmem [shape: bf16[3,64,64], index: 2, kind: input, shape index: {}]
  %s3 = inlined_call_operand.vmem [shape: f32[1,128], index: 3, kind: input, shape index: {}]
  %s4 = inlined_call_operand.vmem [shape: bf16[3,128,128], index: 4, kind: input, shape index: {}]
  %s5 = inlined_call_operand.vmem [shape: bf16[3,32,64], index: 5, kind: input, shape index: {}]
  %s6 = inlined_call_operand.vmem [shape: f32[1,128], index: 6, kind: input, shape index: {}]
  %s7 = inlined_call_operand.vmem [shape: bf16[3,128,64], index: 7, kind: input, shape index: {}]
  %s8 = inlined_call_operand.vmem [shape: bf16[3,16,32], index: 8, kind: input, shape index: {}]
  %s9 = inlined_call_operand.vmem [shape: f32[1,64], index: 9, kind: input, shape index: {}]
  %s10 = inlined_call_operand.vmem [shape: bf16[4,4,16], index: 10, kind: input, shape index: {}]
  %s11 = inlined_call_operand.vmem [shape: bf16[4,64,32], index: 11, kind: input, shape index: {}]
  %s12 = inlined_call_operand.vmem [shape: f32[1,32], index: 12, kind: input, shape index: {}]
  %s13 = inlined_call_operand.vmem [shape: bf16[32,1], index: 13, kind: input, shape index: {}]
  %s14 = inlined_call_operand.<no memory space> [shape: f32[1,1], index: 14, kind: input, shape index: {}]
  %s15 = inlined_call_operand.vmem [shape: f32[2], index: 15, kind: output, shape index: {}]
  %s16 = sld [smem:[#allocation0]]
  $region70: #{adversarial_forward.1} parent=0
    _
  %s18 = ssub.s32 1, %s16
  %s19 = scalar_select 0, %s18, %s16
  %v20 = vstv %s14
  %21 = vst [vmem:[#allocation2] sm:$0x1] %v20
  $region1: #{adversarial_forward.1} parent=0
    #allocation3 [shape = 'u8[512]{0}', space=smem, size = 0x200, scoped, tag = 'output window, operand 0, single buffered']
    #allocation4 [shape = 's32[1]{0}', space=sflag, size = 0x4, scoped, tag = 'scoped memory for adversarial_forward.1']
    %22 = vsyncpa [#allocation4], 0
    // Predicated region
    $region2: #{adversarial_forward.1} parent=1 // pred_check
      _
    $region3: #{adversarial_forward.1} parent=1 // pred_check_branch
      %24 = sbr.rel (0) target = $region5
    $region4: #{adversarial_forward.1} parent=1 // pred_region
      _
    $region5: #{adversarial_forward.1} parent=1 // pred_fallthru
      _
    // Predicated region
    $region6: #{adversarial_forward.1} parent=1 // pred_check
      _
    $region7: #{adversarial_forward.1} parent=1 // pred_check_branch
      %26 = sbr.rel (0) target = $region9
    $region8: #{adversarial_forward.1} parent=1 // pred_region
      _
    $region9: #{adversarial_forward.1} parent=1 // pred_fallthru
      _
    // Predicated region
    $region10: #{adversarial_forward.1} parent=1 // pred_check
      _
    $region11: #{adversarial_forward.1} parent=1 // pred_check_branch
      %28 = sbr.rel (0) target = $region13
    $region12: #{adversarial_forward.1} parent=1 // pred_region
      _
    $region13: #{adversarial_forward.1} parent=1 // pred_fallthru
      _
    // Predicated region
    $region14: #{adversarial_forward.1} parent=1 // pred_check
      _
    $region15: #{adversarial_forward.1} parent=1 // pred_check_branch
      %30 = sbr.rel (0) target = $region17
    $region16: #{adversarial_forward.1} parent=1 // pred_region
      _
    $region17: #{adversarial_forward.1} parent=1 // pred_fallthru
      _
    // Predicated region
    $region18: #{adversarial_forward.1} parent=1 // pred_check
      _
    $region19: #{adversarial_forward.1} parent=1 // pred_check_branch
      %32 = sbr.rel (0) target = $region21
    $region20: #{adversarial_forward.1} parent=1 // pred_region
      _
    $region21: #{adversarial_forward.1} parent=1 // pred_fallthru
      _
    // Predicated region
    $region22: #{adversarial_forward.1} parent=1 // pred_check
      _
    $region23: #{adversarial_forward.1} parent=1 // pred_check_branch
      %34 = sbr.rel (0) target = $region25
    $region24: #{adversarial_forward.1} parent=1 // pred_region
      _
    $region25: #{adversarial_forward.1} parent=1 // pred_fallthru
      _
    // Predicated region
    $region26: #{adversarial_forward.1} parent=1 // pred_check
      _
    $region27: #{adversarial_forward.1} parent=1 // pred_check_branch
      %36 = sbr.rel (0) target = $region29
    $region28: #{adversarial_forward.1} parent=1 // pred_region
      _
    $region29: #{adversarial_forward.1} parent=1 // pred_fallthru
      _
    // Predicated region
    $region30: #{adversarial_forward.1} parent=1 // pred_check
      _
    $region31: #{adversarial_forward.1} parent=1 // pred_check_branch
      %38 = sbr.rel (0) target = $region33
    $region32: #{adversarial_forward.1} parent=1 // pred_region
      _
    $region33: #{adversarial_forward.1} parent=1 // pred_fallthru
      _
    // Predicated region
    $region34: #{adversarial_forward.1} parent=1 // pred_check
      _
    $region35: #{adversarial_forward.1} parent=1 // pred_check_branch
      %40 = sbr.rel (0) target = $region37
    $region36: #{adversarial_forward.1} parent=1 // pred_region
      _
    $region37: #{adversarial_forward.1} parent=1 // pred_fallthru
      _
    // Predicated region
    $region38: #{adversarial_forward.1} parent=1 // pred_check
      _
    $region39: #{adversarial_forward.1} parent=1 // pred_check_branch
      %42 = sbr.rel (0) target = $region41
    $region40: #{adversarial_forward.1} parent=1 // pred_region
      _
    $region41: #{adversarial_forward.1} parent=1 // pred_fallthru
      _
    // Predicated region
    $region42: #{adversarial_forward.1} parent=1 // pred_check
      _
    $region43: #{adversarial_forward.1} parent=1 // pred_check_branch
      %44 = sbr.rel (0) target = $region45
    $region44: #{adversarial_forward.1} parent=1 // pred_region
      _
    $region45: #{adversarial_forward.1} parent=1 // pred_fallthru
      _
    // Predicated region
    $region46: #{adversarial_forward.1} parent=1 // pred_check
      _
    $region47: #{adversarial_forward.1} parent=1 // pred_check_branch
      %46 = sbr.rel (0) target = $region49
    $region48: #{adversarial_forward.1} parent=1 // pred_region
      _
    $region49: #{adversarial_forward.1} parent=1 // pred_fallthru
      _
    // Predicated region
    $region50: #{adversarial_forward.1} parent=1 // pred_check
      _
    $region51: #{adversarial_forward.1} parent=1 // pred_check_branch
      %48 = sbr.rel (0) target = $region53
    $region52: #{adversarial_forward.1} parent=1 // pred_region
      _
    $region53: #{adversarial_forward.1} parent=1 // pred_fallthru
      _
    // Predicated region
    $region54: #{adversarial_forward.1} parent=1 // pred_check
      _
    $region55: #{adversarial_forward.1} parent=1 // pred_check_branch
      %50 = sbr.rel (0) target = $region57
    $region56: #{adversarial_forward.1} parent=1 // pred_region
      _
    $region57: #{adversarial_forward.1} parent=1 // pred_fallthru
      _
    // Predicated region
    $region58: #{adversarial_forward.1} parent=1 // pred_check
      _
    $region59: #{adversarial_forward.1} parent=1 // pred_check_branch
      %52 = sbr.rel (0) target = $region61
    $region60: #{adversarial_forward.1} parent=1 // pred_region
      _
    $region61: #{adversarial_forward.1} parent=1 // pred_fallthru
      _
    %v54 = vld [vmem:[%s0] sm:$0xf]
    %v55 = vld [vmem:[%s0 + $0x4] sm:$0xf]
    %v56 = vld [vmem:[%s0 + $0x8] sm:$0xf]
    %v57 = vld [vmem:[%s0 + $0xc] sm:$0xf]
    %v58 = vld [vmem:[%s0 + $0x10] sm:$0xf]
    %v59 = vld [vmem:[%s0 + $0x14] sm:$0xf]
    %v60 = vld [vmem:[%s0 + $0x18] sm:$0xf]
    %v61 = vld [vmem:[%s0 + $0x1c] sm:$0xf]
    %v62 = vld [vmem:[%s2] sm:$0xf]
    %v63 = vld [vmem:[%s2 + $0x4] sm:$0xf]
    %v64 = vld [vmem:[%s2 + $0x8] sm:$0xf]
    %v65 = vld [vmem:[%s2 + $0xc] sm:$0xf]
    %v66 = vld [vmem:[%s2 + $0x10] sm:$0xf]
    %v67 = vld [vmem:[%s2 + $0x14] sm:$0xf]
    %v68 = vld [vmem:[%s2 + $0x18] sm:$0xf]
    %v69 = vld [vmem:[%s2 + $0x1c] sm:$0xf]
    %v78 = vunpack.c.l.b16 %v62
    %v79 = vunpack.c.l.b16 %v63
    %v80 = vunpack.c.l.b16 %v64
    %v81 = vunpack.c.l.b16 %v65
    %v82 = vunpack.c.l.b16 %v66
    %v83 = vunpack.c.l.b16 %v67
    %v84 = vunpack.c.l.b16 %v68
    %v85 = vunpack.c.l.b16 %v69
    %v86 = vpack.c.b16 %v79, %v78
    %v87 = vpack.c.b16 %v81, %v80
    %v88 = vpack.c.b16 %v83, %v82
    %v89 = vpack.c.b16 %v85, %v84
    %v98 = vunpack.c.l.b16 %v54
    %v99 = vunpack.c.l.b16 %v55
    %v100 = vunpack.c.l.b16 %v56
    %v101 = vunpack.c.l.b16 %v57
    %v102 = vunpack.c.l.b16 %v58
    %v103 = vunpack.c.l.b16 %v59
    %v104 = vunpack.c.l.b16 %v60
    %v105 = vunpack.c.l.b16 %v61
    %v106 = vpack.c.b16 %v99, %v98
    %v107 = vpack.c.b16 %v101, %v100
    %v108 = vpack.c.b16 %v103, %v102
    %v109 = vpack.c.b16 %v105, %v104
    %vm114 = vcmask 523264
    %v116 = vsel %vm114, %v86, 0
    %v119 = vsel %vm114, %v87, 0
    %v122 = vsel %vm114, %v88, 0
    %v125 = vsel %vm114, %v89, 0
    %127 = vmatprep.subr.bf16.mxu0 0
    %128 = vmatpush1.bf16.msra.mxu0 %v106
    %129 = vmatprep.subr.bf16.mxu0 0
    %130 = vmatpush1.bf16.msra.mxu0 %v107
    %131 = vmatprep.subr.bf16.mxu0 0
    %132 = vmatpush1.bf16.msra.mxu0 %v108
    %133 = vmatprep.subr.bf16.mxu0 0
    %134 = vmatpush1.bf16.msra.mxu0 %v109
    %135 = vmatprep.subr.bf16.mxu0 0
    %136 = vmatpush1.bf16.msra.mxu0 0
    %137 = vmatprep.subr.bf16.mxu0 0
    %138 = vmatpush1.bf16.msra.mxu0 0
    %139 = vmatprep.subr.bf16.mxu0 0
    %140 = vmatpush1.bf16.msra.mxu0 0
    %141 = vmatprep.subr.bf16.mxu0 0
    %142 = vmatpush1.bf16.msra.mxu0 0
    %143 = vmatprep.subr.bf16.mxu0 0
    %144 = vmatpush1.bf16.msra.mxu0 0
    %145 = vmatprep.subr.bf16.mxu0 0
    %146 = vmatpush1.bf16.msra.mxu0 0
    %147 = vmatprep.subr.bf16.mxu0 0
    %148 = vmatpush1.bf16.msra.mxu0 0
    %149 = vmatprep.subr.bf16.mxu0 0
    %150 = vmatpush1.bf16.msra.mxu0 0
    %151 = vmatprep.subr.bf16.mxu0 0
    %152 = vmatpush1.bf16.msra.mxu0 0
    %153 = vmatprep.subr.bf16.mxu0 0
    %154 = vmatpush1.bf16.msra.mxu0 0
    %155 = vmatprep.subr.bf16.mxu0 0
    %156 = vmatpush1.bf16.msra.mxu0 0
    %157 = vmatprep.subr.bf16.mxu0 0
    %158 = vmatpush1.bf16.msra.mxu0 0
    %159 = vmatprep.mubr.bf16.mxu0 0
    %160 = vmatmul.mubr.bf16.gmra.mrb[0].mxu0 %v116
    %v161 = vpop.f32.mrb[0].mxu0
    %v162 = vadd.f32 0.0, %v161
    %v163 = vpop.f32.mrb[0].mxu0
    %v164 = vpop.f32.mrb[0].mxu0
    %v165 = vadd.f32 0.0, %v164
    %v166 = vpop.f32.mrb[0].mxu0
    %167 = vmatprep.mubr.bf16.mxu0 0
    %168 = vmatmul.mubr.bf16.gmra.mrb[0].mxu0 %v119
    %v169 = vpop.f32.mrb[0].mxu0
    %v170 = vadd.f32 0.0, %v169
    %v171 = vpop.f32.mrb[0].mxu0
    %v172 = vpop.f32.mrb[0].mxu0
    %v173 = vadd.f32 0.0, %v172
    %v174 = vpop.f32.mrb[0].mxu0
    %175 = vmatprep.mubr.bf16.mxu0 0
    %176 = vmatmul.mubr.bf16.gmra.mrb[0].mxu0 %v122
    %v177 = vpop.f32.mrb[0].mxu0
    %v178 = vadd.f32 0.0, %v177
    %v179 = vpop.f32.mrb[0].mxu0
    %v180 = vpop.f32.mrb[0].mxu0
    %v181 = vadd.f32 0.0, %v180
    %v182 = vpop.f32.mrb[0].mxu0
    %183 = vmatprep.mubr.bf16.mxu0 0
    %184 = vmatmul.mubr.bf16.gmra.mrb[0].mxu0 %v125
    %v185 = vpop.f32.mrb[0].mxu0
    %v186 = vadd.f32 0.0, %v185
    %v187 = vpop.f32.mrb[0].mxu0
    %v188 = vpop.f32.mrb[0].mxu0
    %v189 = vadd.f32 0.0, %v188
    %v190 = vpop.f32.mrb[0].mxu0
    %191 = vdwg.mxu0
    %v192 = vpack.c.bf16 %v165, %v162
    %v193 = vpack.c.bf16 %v173, %v170
    %v194 = vpack.c.bf16 %v181, %v178
    %v195 = vpack.c.bf16 %v189, %v186
    %v196 = vld [vmem:[%s1] sm:$0xf]
    %v197 = vld [vmem:[%s1 + $0x4] sm:$0xf]
    %v198 = vld [vmem:[%s1 + $0x8] sm:$0xf]
    %v199 = vld [vmem:[%s1 + $0xc] sm:$0xf]
    %v200 = vld [vmem:[%s1 + $0x10] sm:$0xf]
    %v201 = vld [vmem:[%s1 + $0x14] sm:$0xf]
    %s202 = scalar_lea.vmem %s2, 32
    %v203 = vld [vmem:[%s202] sm:$0xf]
    %v204 = vld [vmem:[%s202 + $0x4] sm:$0xf]
    %v205 = vld [vmem:[%s202 + $0x8] sm:$0xf]
    %v206 = vld [vmem:[%s202 + $0xc] sm:$0xf]
    %v207 = vld [vmem:[%s202 + $0x10] sm:$0xf]
    %v208 = vld [vmem:[%s202 + $0x14] sm:$0xf]
    %v209 = vld [vmem:[%s202 + $0x18] sm:$0xf]
    %v210 = vld [vmem:[%s202 + $0x1c] sm:$0xf]
    %v219 = vunpack.c.l.b16 %v203
    %v220 = vunpack.c.l.b16 %v204
    %v221 = vunpack.c.l.b16 %v205
    %v222 = vunpack.c.l.b16 %v206
    %v223 = vunpack.c.l.b16 %v207
    %v224 = vunpack.c.l.b16 %v208
    %v225 = vunpack.c.l.b16 %v209
    %v226 = vunpack.c.l.b16 %v210
    %v227 = vpack.c.b16 %v220, %v219
    %v228 = vpack.c.b16 %v222, %v221
    %v229 = vpack.c.b16 %v224, %v223
    %v230 = vpack.c.b16 %v226, %v225
    %v232 = vsel %vm114, %v227, 0
    %v235 = vsel %vm114, %v228, 0
    %v238 = vsel %vm114, %v229, 0
    %v241 = vsel %vm114, %v230, 0
    %243 = vmatprep.subr.bf16.mxu0 0
    %244 = vmatpush1.bf16.msra.mxu0 %v106
    %245 = vmatprep.subr.bf16.mxu0 0
    %246 = vmatpush1.bf16.msra.mxu0 %v107
    %247 = vmatprep.subr.bf16.mxu0 0
    %248 = vmatpush1.bf16.msra.mxu0 %v108
    %249 = vmatprep.subr.bf16.mxu0 0
    %250 = vmatpush1.bf16.msra.mxu0 %v109
    %251 = vmatprep.subr.bf16.mxu0 0
    %252 = vmatpush1.bf16.msra.mxu0 0
    %253 = vmatprep.subr.bf16.mxu0 0
    %254 = vmatpush1.bf16.msra.mxu0 0
    %255 = vmatprep.subr.bf16.mxu0 0
    %256 = vmatpush1.bf16.msra.mxu0 0
    %257 = vmatprep.subr.bf16.mxu0 0
    %258 = vmatpush1.bf16.msra.mxu0 0
    %259 = vmatprep.subr.bf16.mxu0 0
    %260 = vmatpush1.bf16.msra.mxu0 0
    %261 = vmatprep.subr.bf16.mxu0 0
    %262 = vmatpush1.bf16.msra.mxu0 0
    %263 = vmatprep.subr.bf16.mxu0 0
    %264 = vmatpush1.bf16.msra.mxu0 0
    %265 = vmatprep.subr.bf16.mxu0 0
    %266 = vmatpush1.bf16.msra.mxu0 0
    %267 = vmatprep.subr.bf16.mxu0 0
    %268 = vmatpush1.bf16.msra.mxu0 0
    %269 = vmatprep.subr.bf16.mxu0 0
    %270 = vmatpush1.bf16.msra.mxu0 0
    %271 = vmatprep.subr.bf16.mxu0 0
    %272 = vmatpush1.bf16.msra.mxu0 0
    %273 = vmatprep.subr.bf16.mxu0 0
    %274 = vmatpush1.bf16.msra.mxu0 0
    %275 = vmatprep.mubr.bf16.mxu0 0
    %276 = vmatmul.mubr.bf16.gmra.mrb[0].mxu0 %v232
    %v277 = vpop.f32.mrb[0].mxu0
    %v278 = vadd.f32 0.0, %v277
    %v279 = vpop.f32.mrb[0].mxu0
    %v280 = vpop.f32.mrb[0].mxu0
    %v281 = vadd.f32 0.0, %v280
    %v282 = vpop.f32.mrb[0].mxu0
    %283 = vmatprep.mubr.bf16.mxu0 0
    %284 = vmatmul.mubr.bf16.gmra.mrb[0].mxu0 %v235
    %v285 = vpop.f32.mrb[0].mxu0
    %v286 = vadd.f32 0.0, %v285
    %v287 = vpop.f32.mrb[0].mxu0
    %v288 = vpop.f32.mrb[0].mxu0
    %v289 = vadd.f32 0.0, %v288
    %v290 = vpop.f32.mrb[0].mxu0
    %291 = vmatprep.mubr.bf16.mxu0 0
    %292 = vmatmul.mubr.bf16.gmra.mrb[0].mxu0 %v238
    %v293 = vpop.f32.mrb[0].mxu0
    %v294 = vadd.f32 0.0, %v293
    %v295 = vpop.f32.mrb[0].mxu0
    %v296 = vpop.f32.mrb[0].mxu0
    %v297 = vadd.f32 0.0, %v296
    %v298 = vpop.f32.mrb[0].mxu0
    %299 = vmatprep.mubr.bf16.mxu0 0
    %300 = vmatmul.mubr.bf16.gmra.mrb[0].mxu0 %v241
    %v301 = vpop.f32.mrb[0].mxu0
    %v302 = vadd.f32 0.0, %v301
    %v303 = vpop.f32.mrb[0].mxu0
    %v304 = vpop.f32.mrb[0].mxu0
    %v305 = vadd.f32 0.0, %v304
    %v306 = vpop.f32.mrb[0].mxu0
    %307 = vdwg.mxu0
    %v308 = vpack.c.bf16 %v281, %v278
    %v309 = vpack.c.bf16 %v289, %v286
    %v310 = vpack.c.bf16 %v297, %v294
    %v311 = vpack.c.bf16 %v305, %v302
    %s312 = scalar_lea.vmem %s1, 24
    %v313 = vld [vmem:[%s312] sm:$0xf]
    %v314 = vld [vmem:[%s312 + $0x4] sm:$0xf]
    %v315 = vld [vmem:[%s312 + $0x8] sm:$0xf]
    %v316 = vld [vmem:[%s312 + $0xc] sm:$0xf]
    %v317 = vld [vmem:[%s312 + $0x10] sm:$0xf]
    %v318 = vld [vmem:[%s312 + $0x14] sm:$0xf]
    %v325 = vunpack.c.l.b16 %v313
    %v326 = vunpack.c.l.b16 %v314
    %v327 = vunpack.c.l.b16 %v315
    %v328 = vunpack.c.l.b16 %v316
    %v329 = vunpack.c.l.b16 %v317
    %v330 = vunpack.c.l.b16 %v318
    %v331 = vpack.c.b16 %v326, %v325
    %v332 = vpack.c.b16 %v328, %v327
    %v333 = vpack.c.b16 %v330, %v329
    %vm337 = vcmask 392192
    %v339 = vsel %vm337, %v308, 0
    %v342 = vsel %vm337, %v309, 0
    %v345 = vsel %vm337, %v310, 0
    %v348 = vsel %vm337, %v311, 0
    %350 = vmatprep.subr.bf16.mxu0 0
    %351 = vmatpush1.bf16.msra.mxu0 %v331
    %352 = vmatprep.subr.bf16.mxu0 0
    %353 = vmatpush1.bf16.msra.mxu0 %v332
    %354 = vmatprep.subr.bf16.mxu0 0
    %355 = vmatpush1.bf16.msra.mxu0 %v333
    %356 = vmatprep.subr.bf16.mxu0 0
    %357 = vmatpush1.bf16.msra.mxu0 0
    %358 = vmatprep.subr.bf16.mxu0 0
    %359 = vmatpush1.bf16.msra.mxu0 0
    %360 = vmatprep.subr.bf16.mxu0 0
    %361 = vmatpush1.bf16.msra.mxu0 0
    %362 = vmatprep.subr.bf16.mxu0 0
    %363 = vmatpush1.bf16.msra.mxu0 0
    %364 = vmatprep.subr.bf16.mxu0 0
    %365 = vmatpush1.bf16.msra.mxu0 0
    %366 = vmatprep.subr.bf16.mxu0 0
    %367 = vmatpush1.bf16.msra.mxu0 0
    %368 = vmatprep.subr.bf16.mxu0 0
    %369 = vmatpush1.bf16.msra.mxu0 0
    %370 = vmatprep.subr.bf16.mxu0 0
    %371 = vmatpush1.bf16.msra.mxu0 0
    %372 = vmatprep.subr.bf16.mxu0 0
    %373 = vmatpush1.bf16.msra.mxu0 0
    %374 = vmatprep.subr.bf16.mxu0 0
    %375 = vmatpush1.bf16.msra.mxu0 0
    %376 = vmatprep.subr.bf16.mxu0 0
    %377 = vmatpush1.bf16.msra.mxu0 0
    %378 = vmatprep.subr.bf16.mxu0 0
    %379 = vmatpush1.bf16.msra.mxu0 0
    %380 = vmatprep.subr.bf16.mxu0 0
    %381 = vmatpush1.bf16.msra.mxu0 0
    %382 = vmatprep.mubr.bf16.mxu0 0
    %383 = vmatmul.mubr.bf16.gmra.mrb[0].mxu0 %v339
    %v384 = vpop.f32.mrb[0].mxu0
    %v385 = vadd.f32 0.0, %v384
    %v386 = vpop.f32.mrb[0].mxu0
    %v387 = vpop.f32.mrb[0].mxu0
    %v388 = vadd.f32 0.0, %v387
    %v389 = vpop.f32.mrb[0].mxu0
    %390 = vmatprep.mubr.bf16.mxu0 0
    %391 = vmatmul.mubr.bf16.gmra.mrb[0].mxu0 %v342
    %v392 = vpop.f32.mrb[0].mxu0
    %v393 = vadd.f32 0.0, %v392
    %v394 = vpop.f32.mrb[0].mxu0
    %v395 = vpop.f32.mrb[0].mxu0
    %v396 = vadd.f32 0.0, %v395
    %v397 = vpop.f32.mrb[0].mxu0
    %398 = vmatprep.mubr.bf16.mxu0 0
    %399 = vmatmul.mubr.bf16.gmra.mrb[0].mxu0 %v345
    %v400 = vpop.f32.mrb[0].mxu0
    %v401 = vadd.f32 0.0, %v400
    %v402 = vpop.f32.mrb[0].mxu0
    %v403 = vpop.f32.mrb[0].mxu0
    %v404 = vadd.f32 0.0, %v403
    %v405 = vpop.f32.mrb[0].mxu0
    %406 = vmatprep.mubr.bf16.mxu0 0
    %407 = vmatmul.mubr.bf16.gmra.mrb[0].mxu0 %v348
    %v408 = vpop.f32.mrb[0].mxu0
    %v409 = vadd.f32 0.0, %v408
    %v410 = vpop.f32.mrb[0].mxu0
    %v411 = vpop.f32.mrb[0].mxu0
    %v412 = vadd.f32 0.0, %v411
    %v413 = vpop.f32.mrb[0].mxu0
    %414 = vdwg.mxu0
    %v421 = vunpack.c.l.b16 %v196
    %v422 = vunpack.c.l.b16 %v197
    %v423 = vunpack.c.l.b16 %v198
    %v424 = vunpack.c.l.b16 %v199
    %v425 = vunpack.c.l.b16 %v200
    %v426 = vunpack.c.l.b16 %v201
    %v427 = vpack.c.b16 %v422, %v421
    %v428 = vpack.c.b16 %v424, %v423
    %v429 = vpack.c.b16 %v426, %v425
    %v434 = vsel %vm337, %v192, 0
    %v437 = vsel %vm337, %v193, 0
    %v440 = vsel %vm337, %v194, 0
    %v443 = vsel %vm337, %v195, 0
    %445 = vmatprep.subr.bf16.mxu0 0
    %446 = vmatpush1.bf16.msra.mxu0 %v427
    %447 = vmatprep.subr.bf16.mxu0 0
    %448 = vmatpush1.bf16.msra.mxu0 %v428
    %449 = vmatprep.subr.bf16.mxu0 0
    %450 = vmatpush1.bf16.msra.mxu0 %v429
    %451 = vmatprep.subr.bf16.mxu0 0
    %452 = vmatpush1.bf16.msra.mxu0 0
    %453 = vmatprep.subr.bf16.mxu0 0
    %454 = vmatpush1.bf16.msra.mxu0 0
    %455 = vmatprep.subr.bf16.mxu0 0
    %456 = vmatpush1.bf16.msra.mxu0 0
    %457 = vmatprep.subr.bf16.mxu0 0
    %458 = vmatpush1.bf16.msra.mxu0 0
    %459 = vmatprep.subr.bf16.mxu0 0
    %460 = vmatpush1.bf16.msra.mxu0 0
    %461 = vmatprep.subr.bf16.mxu0 0
    %462 = vmatpush1.bf16.msra.mxu0 0
    %463 = vmatprep.subr.bf16.mxu0 0
    %464 = vmatpush1.bf16.msra.mxu0 0
    %465 = vmatprep.subr.bf16.mxu0 0
    %466 = vmatpush1.bf16.msra.mxu0 0
    %467 = vmatprep.subr.bf16.mxu0 0
    %468 = vmatpush1.bf16.msra.mxu0 0
    %469 = vmatprep.subr.bf16.mxu0 0
    %470 = vmatpush1.bf16.msra.mxu0 0
    %471 = vmatprep.subr.bf16.mxu0 0
    %472 = vmatpush1.bf16.msra.mxu0 0
    %473 = vmatprep.subr.bf16.mxu0 0
    %474 = vmatpush1.bf16.msra.mxu0 0
    %475 = vmatprep.subr.bf16.mxu0 0
    %476 = vmatpush1.bf16.msra.mxu0 0
    %477 = vmatprep.mubr.bf16.mxu0 0
    %478 = vmatmul.mubr.bf16.gmra.mrb[0].mxu0 %v434
    %v479 = vpop.f32.mrb[0].mxu0
    %v480 = vadd.f32 %v385, %v479
    %v481 = vpop.f32.mrb[0].mxu0
    %v482 = vpop.f32.mrb[0].mxu0
    %v483 = vadd.f32 %v388, %v482
    %v484 = vpop.f32.mrb[0].mxu0
    %485 = vmatprep.mubr.bf16.mxu0 0
    %486 = vmatmul.mubr.bf16.gmra.mrb[0].mxu0 %v437
    %v487 = vpop.f32.mrb[0].mxu0
    %v488 = vadd.f32 %v393, %v487
    %v489 = vpop.f32.mrb[0].mxu0
    %v490 = vpop.f32.mrb[0].mxu0
    %v491 = vadd.f32 %v396, %v490
    %v492 = vpop.f32.mrb[0].mxu0
    %493 = vmatprep.mubr.bf16.mxu0 0
    %494 = vmatmul.mubr.bf16.gmra.mrb[0].mxu0 %v440
    %v495 = vpop.f32.mrb[0].mxu0
    %v496 = vadd.f32 %v401, %v495
    %v497 = vpop.f32.mrb[0].mxu0
    %v498 = vpop.f32.mrb[0].mxu0
    %v499 = vadd.f32 %v404, %v498
    %v500 = vpop.f32.mrb[0].mxu0
    %501 = vmatprep.mubr.bf16.mxu0 0
    %502 = vmatmul.mubr.bf16.gmra.mrb[0].mxu0 %v443
    %v503 = vpop.f32.mrb[0].mxu0
    %v504 = vadd.f32 %v409, %v503
    %v505 = vpop.f32.mrb[0].mxu0
    %v506 = vpop.f32.mrb[0].mxu0
    %v507 = vadd.f32 %v412, %v506
    %v508 = vpop.f32.mrb[0].mxu0
    %509 = vdwg.mxu0
    %s510 = scalar_lea.vmem %s2, 64
    %v511 = vld [vmem:[%s510] sm:$0xf]
    %v512 = vld [vmem:[%s510 + $0x4] sm:$0xf]
    %v513 = vld [vmem:[%s510 + $0x8] sm:$0xf]
    %v514 = vld [vmem:[%s510 + $0xc] sm:$0xf]
    %v515 = vld [vmem:[%s510 + $0x10] sm:$0xf]
    %v516 = vld [vmem:[%s510 + $0x14] sm:$0xf]
    %v517 = vld [vmem:[%s510 + $0x18] sm:$0xf]
    %v518 = vld [vmem:[%s510 + $0x1c] sm:$0xf]
    %v527 = vunpack.c.l.b16 %v511
    %v528 = vunpack.c.l.b16 %v512
    %v529 = vunpack.c.l.b16 %v513
    %v530 = vunpack.c.l.b16 %v514
    %v531 = vunpack.c.l.b16 %v515
    %v532 = vunpack.c.l.b16 %v516
    %v533 = vunpack.c.l.b16 %v517
    %v534 = vunpack.c.l.b16 %v518
    %v535 = vpack.c.b16 %v528, %v527
    %v536 = vpack.c.b16 %v530, %v529
    %v537 = vpack.c.b16 %v532, %v531
    %v538 = vpack.c.b16 %v534, %v533
    %v540 = vsel %vm114, %v535, 0
    %v543 = vsel %vm114, %v536, 0
    %v546 = vsel %vm114, %v537, 0
    %v549 = vsel %vm114, %v538, 0
    %551 = vmatprep.subr.bf16.mxu0 0
    %552 = vmatpush1.bf16.msra.mxu0 %v106
    %553 = vmatprep.subr.bf16.mxu0 0
    %554 = vmatpush1.bf16.msra.mxu0 %v107
    %555 = vmatprep.subr.bf16.mxu0 0
    %556 = vmatpush1.bf16.msra.mxu0 %v108
    %557 = vmatprep.subr.bf16.mxu0 0
    %558 = vmatpush1.bf16.msra.mxu0 %v109
    %559 = vmatprep.subr.bf16.mxu0 0
    %560 = vmatpush1.bf16.msra.mxu0 0
    %561 = vmatprep.subr.bf16.mxu0 0
    %562 = vmatpush1.bf16.msra.mxu0 0
    %563 = vmatprep.subr.bf16.mxu0 0
    %564 = vmatpush1.bf16.msra.mxu0 0
    %565 = vmatprep.subr.bf16.mxu0 0
    %566 = vmatpush1.bf16.msra.mxu0 0
    %567 = vmatprep.subr.bf16.mxu0 0
    %568 = vmatpush1.bf16.msra.mxu0 0
    %569 = vmatprep.subr.bf16.mxu0 0
    %570 = vmatpush1.bf16.msra.mxu0 0
    %571 = vmatprep.subr.bf16.mxu0 0
    %572 = vmatpush1.bf16.msra.mxu0 0
    %573 = vmatprep.subr.bf16.mxu0 0
    %574 = vmatpush1.bf16.msra.mxu0 0
    %575 = vmatprep.subr.bf16.mxu0 0
    %576 = vmatpush1.bf16.msra.mxu0 0
    %577 = vmatprep.subr.bf16.mxu0 0
    %578 = vmatpush1.bf16.msra.mxu0 0
    %579 = vmatprep.subr.bf16.mxu0 0
    %580 = vmatpush1.bf16.msra.mxu0 0
    %581 = vmatprep.subr.bf16.mxu0 0
    %582 = vmatpush1.bf16.msra.mxu0 0
    %583 = vmatprep.mubr.bf16.mxu0 0
    %584 = vmatmul.mubr.bf16.gmra.mrb[0].mxu0 %v540
    %v585 = vpop.f32.mrb[0].mxu0
    %v586 = vadd.f32 0.0, %v585
    %v587 = vpop.f32.mrb[0].mxu0
    %v588 = vpop.f32.mrb[0].mxu0
    %v589 = vadd.f32 0.0, %v588
    %v590 = vpop.f32.mrb[0].mxu0
    %591 = vmatprep.mubr.bf16.mxu0 0
    %592 = vmatmul.mubr.bf16.gmra.mrb[0].mxu0 %v543
    %v593 = vpop.f32.mrb[0].mxu0
    %v594 = vadd.f32 0.0, %v593
    %v595 = vpop.f32.mrb[0].mxu0
    %v596 = vpop.f32.mrb[0].mxu0
    %v597 = vadd.f32 0.0, %v596
    %v598 = vpop.f32.mrb[0].mxu0
    %599 = vmatprep.mubr.bf16.mxu0 0
    %600 = vmatmul.mubr.bf16.gmra.mrb[0].mxu0 %v546
    %v601 = vpop.f32.mrb[0].mxu0
    %v602 = vadd.f32 0.0, %v601
    %v603 = vpop.f32.mrb[0].mxu0
    %v604 = vpop.f32.mrb[0].mxu0
    %v605 = vadd.f32 0.0, %v604
    %v606 = vpop.f32.mrb[0].mxu0
    %607 = vmatprep.mubr.bf16.mxu0 0
    %608 = vmatmul.mubr.bf16.gmra.mrb[0].mxu0 %v549
    %v609 = vpop.f32.mrb[0].mxu0
    %v610 = vadd.f32 0.0, %v609
    %v611 = vpop.f32.mrb[0].mxu0
    %v612 = vpop.f32.mrb[0].mxu0
    %v613 = vadd.f32 0.0, %v612
    %v614 = vpop.f32.mrb[0].mxu0
    %615 = vdwg.mxu0
    %v616 = vpack.c.bf16 %v589, %v586
    %v617 = vpack.c.bf16 %v597, %v594
    %v618 = vpack.c.bf16 %v605, %v602
    %v619 = vpack.c.bf16 %v613, %v610
    %s620 = scalar_lea.vmem %s1, 48
    %v621 = vld [vmem:[%s620] sm:$0xf]
    %v622 = vld [vmem:[%s620 + $0x4] sm:$0xf]
    %v623 = vld [vmem:[%s620 + $0x8] sm:$0xf]
    %v624 = vld [vmem:[%s620 + $0xc] sm:$0xf]
    %v625 = vld [vmem:[%s620 + $0x10] sm:$0xf]
    %v626 = vld [vmem:[%s620 + $0x14] sm:$0xf]
    %v633 = vunpack.c.l.b16 %v621
    %v634 = vunpack.c.l.b16 %v622
    %v635 = vunpack.c.l.b16 %v623
    %v636 = vunpack.c.l.b16 %v624
    %v637 = vunpack.c.l.b16 %v625
    %v638 = vunpack.c.l.b16 %v626
    %v639 = vpack.c.b16 %v634, %v633
    %v640 = vpack.c.b16 %v636, %v635
    %v641 = vpack.c.b16 %v638, %v637
    %v646 = vsel %vm337, %v616, 0
    %v649 = vsel %vm337, %v617, 0
    %v652 = vsel %vm337, %v618, 0
    %v655 = vsel %vm337, %v619, 0
    %657 = vmatprep.subr.bf16.mxu0 0
    %658 = vmatpush1.bf16.msra.mxu0 %v639
    %659 = vmatprep.subr.bf16.mxu0 0
    %660 = vmatpush1.bf16.msra.mxu0 %v640
    %661 = vmatprep.subr.bf16.mxu0 0
    %662 = vmatpush1.bf16.msra.mxu0 %v641
    %663 = vmatprep.subr.bf16.mxu0 0
    %664 = vmatpush1.bf16.msra.mxu0 0
    %665 = vmatprep.subr.bf16.mxu0 0
    %666 = vmatpush1.bf16.msra.mxu0 0
    %667 = vmatprep.subr.bf16.mxu0 0
    %668 = vmatpush1.bf16.msra.mxu0 0
    %669 = vmatprep.subr.bf16.mxu0 0
    %670 = vmatpush1.bf16.msra.mxu0 0
    %671 = vmatprep.subr.bf16.mxu0 0
    %672 = vmatpush1.bf16.msra.mxu0 0
    %673 = vmatprep.subr.bf16.mxu0 0
    %674 = vmatpush1.bf16.msra.mxu0 0
    %675 = vmatprep.subr.bf16.mxu0 0
    %676 = vmatpush1.bf16.msra.mxu0 0
    %677 = vmatprep.subr.bf16.mxu0 0
    %678 = vmatpush1.bf16.msra.mxu0 0
    %679 = vmatprep.subr.bf16.mxu0 0
    %680 = vmatpush1.bf16.msra.mxu0 0
    %681 = vmatprep.subr.bf16.mxu0 0
    %682 = vmatpush1.bf16.msra.mxu0 0
    %683 = vmatprep.subr.bf16.mxu0 0
    %684 = vmatpush1.bf16.msra.mxu0 0
    %685 = vmatprep.subr.bf16.mxu0 0
    %686 = vmatpush1.bf16.msra.mxu0 0
    %687 = vmatprep.subr.bf16.mxu0 0
    %688 = vmatpush1.bf16.msra.mxu0 0
    %689 = vmatprep.mubr.bf16.mxu0 0
    %690 = vmatmul.mubr.bf16.gmra.mrb[0].mxu0 %v646
    %v691 = vpop.f32.mrb[0].mxu0
    %v692 = vadd.f32 0.0, %v691
    %v693 = vpop.f32.mrb[0].mxu0
    %v694 = vpop.f32.mrb[0].mxu0
    %v695 = vadd.f32 0.0, %v694
    %v696 = vpop.f32.mrb[0].mxu0
    %697 = vmatprep.mubr.bf16.mxu0 0
    %698 = vmatmul.mubr.bf16.gmra.mrb[0].mxu0 %v649
    %v699 = vpop.f32.mrb[0].mxu0
    %v700 = vadd.f32 0.0, %v699
    %v701 = vpop.f32.mrb[0].mxu0
    %v702 = vpop.f32.mrb[0].mxu0
    %v703 = vadd.f32 0.0, %v702
    %v704 = vpop.f32.mrb[0].mxu0
    %705 = vmatprep.mubr.bf16.mxu0 0
    %706 = vmatmul.mubr.bf16.gmra.mrb[0].mxu0 %v652
    %v707 = vpop.f32.mrb[0].mxu0
    %v708 = vadd.f32 0.0, %v707
    %v709 = vpop.f32.mrb[0].mxu0
    %v710 = vpop.f32.mrb[0].mxu0
    %v711 = vadd.f32 0.0, %v710
    %v712 = vpop.f32.mrb[0].mxu0
    %713 = vmatprep.mubr.bf16.mxu0 0
    %714 = vmatmul.mubr.bf16.gmra.mrb[0].mxu0 %v655
    %v715 = vpop.f32.mrb[0].mxu0
    %v716 = vadd.f32 0.0, %v715
    %v717 = vpop.f32.mrb[0].mxu0
    %v718 = vpop.f32.mrb[0].mxu0
    %v719 = vadd.f32 0.0, %v718
    %v720 = vpop.f32.mrb[0].mxu0
    %721 = vdwg.mxu0
    %v722 = vadd.f32 %v480, %v692
    %v723 = vadd.f32 %v483, %v695
    %v724 = vadd.f32 %v488, %v700
    %v725 = vadd.f32 %v491, %v703
    %v726 = vadd.f32 %v496, %v708
    %v727 = vadd.f32 %v499, %v711
    %v728 = vadd.f32 %v504, %v716
    %v729 = vadd.f32 %v507, %v719
    %v730 = vld [vmem:[%s3] sm:$0x1]
    %v732 = vlaneseq
    %v733 = vshrl.u32 %v732, 7
    %v734 = vsub.s32 0, %v733
    %v735 = vrot.slane %v730, %v734
    %v737 = vadd.f32 %v722, %v735
    %v738 = vadd.f32 %v723, %v735
    %v739 = vadd.f32 %v724, %v735
    %v740 = vadd.f32 %v725, %v735
    %v741 = vadd.f32 %v726, %v735
    %v742 = vadd.f32 %v727, %v735
    %v743 = vadd.f32 %v728, %v735
    %v744 = vadd.f32 %v729, %v735
    %vm745 = vcmp.ge.f32.partialorder %v737, 0.0
    %vm746 = vcmp.ge.f32.partialorder %v738, 0.0
    %vm747 = vcmp.ge.f32.partialorder %v739, 0.0
    %vm748 = vcmp.ge.f32.partialorder %v740, 0.0
    %vm749 = vcmp.ge.f32.partialorder %v741, 0.0
    %vm750 = vcmp.ge.f32.partialorder %v742, 0.0
    %vm751 = vcmp.ge.f32.partialorder %v743, 0.0
    %vm752 = vcmp.ge.f32.partialorder %v744, 0.0
    %v753 = vmul.f32 %v737, 0.2
    %v754 = vmul.f32 %v738, 0.2
    %v755 = vmul.f32 %v739, 0.2
    %v756 = vmul.f32 %v740, 0.2
    %v757 = vmul.f32 %v741, 0.2
    %v758 = vmul.f32 %v742, 0.2
    %v759 = vmul.f32 %v743, 0.2
    %v760 = vmul.f32 %v744, 0.2
    %v761 = vsel %vm745, %v737, %v753
    %v762 = vsel %vm746, %v738, %v754
    %v763 = vsel %vm747, %v739, %v755
    %v764 = vsel %vm748, %v740, %v756
    %v765 = vsel %vm749, %v741, %v757
    %v766 = vsel %vm750, %v742, %v758
    %v767 = vsel %vm751, %v743, %v759
    %v768 = vsel %vm752, %v744, %v760
    %v769 = vpack.c.bf16 %v762, %v761
    %v770 = vpack.c.bf16 %v764, %v763
    %v771 = vpack.c.bf16 %v766, %v765
    %v772 = vpack.c.bf16 %v768, %v767
    %v773 = vld [vmem:[%s5] sm:$0xf]
    %v774 = vld [vmem:[%s5 + $0x4] sm:$0xf]
    %v775 = vld [vmem:[%s5 + $0x8] sm:$0xf]
    %v776 = vld [vmem:[%s5 + $0xc] sm:$0xf]
    %v781 = vunpack.c.l.b16 %v773
    %v782 = vunpack.c.l.b16 %v774
    %v783 = vunpack.c.l.b16 %v775
    %v784 = vunpack.c.l.b16 %v776
    %v785 = vpack.c.b16 %v782, %v781
    %v786 = vpack.c.b16 %v784, %v783
    %v788 = vsel %vm114, %v785, 0
    %v791 = vsel %vm114, %v786, 0
    %793 = vmatprep.subr.bf16.mxu0 0
    %794 = vmatpush1.bf16.msra.mxu0 %v769
    %795 = vmatprep.subr.bf16.mxu0 0
    %796 = vmatpush1.bf16.msra.mxu0 %v770
    %797 = vmatprep.subr.bf16.mxu0 0
    %798 = vmatpush1.bf16.msra.mxu0 %v771
    %799 = vmatprep.subr.bf16.mxu0 0
    %800 = vmatpush1.bf16.msra.mxu0 %v772
    %801 = vmatprep.subr.bf16.mxu0 0
    %802 = vmatpush1.bf16.msra.mxu0 0
    %803 = vmatprep.subr.bf16.mxu0 0
    %804 = vmatpush1.bf16.msra.mxu0 0
    %805 = vmatprep.subr.bf16.mxu0 0
    %806 = vmatpush1.bf16.msra.mxu0 0
    %807 = vmatprep.subr.bf16.mxu0 0
    %808 = vmatpush1.bf16.msra.mxu0 0
    %809 = vmatprep.subr.bf16.mxu0 0
    %810 = vmatpush1.bf16.msra.mxu0 0
    %811 = vmatprep.subr.bf16.mxu0 0
    %812 = vmatpush1.bf16.msra.mxu0 0
    %813 = vmatprep.subr.bf16.mxu0 0
    %814 = vmatpush1.bf16.msra.mxu0 0
    %815 = vmatprep.subr.bf16.mxu0 0
    %816 = vmatpush1.bf16.msra.mxu0 0
    %817 = vmatprep.subr.bf16.mxu0 0
    %818 = vmatpush1.bf16.msra.mxu0 0
    %819 = vmatprep.subr.bf16.mxu0 0
    %820 = vmatpush1.bf16.msra.mxu0 0
    %821 = vmatprep.subr.bf16.mxu0 0
    %822 = vmatpush1.bf16.msra.mxu0 0
    %823 = vmatprep.subr.bf16.mxu0 0
    %824 = vmatpush1.bf16.msra.mxu0 0
    %825 = vmatprep.mubr.bf16.mxu0 0
    %826 = vmatmul.mubr.bf16.gmra.mrb[0].mxu0 %v788
    %v827 = vpop.f32.mrb[0].mxu0
    %v828 = vadd.f32 0.0, %v827
    %v829 = vpop.f32.mrb[0].mxu0
    %v830 = vpop.f32.mrb[0].mxu0
    %v831 = vadd.f32 0.0, %v830
    %v832 = vpop.f32.mrb[0].mxu0
    %833 = vmatprep.mubr.bf16.mxu0 0
    %834 = vmatmul.mubr.bf16.gmra.mrb[0].mxu0 %v791
    %v835 = vpop.f32.mrb[0].mxu0
    %v836 = vadd.f32 0.0, %v835
    %v837 = vpop.f32.mrb[0].mxu0
    %v838 = vpop.f32.mrb[0].mxu0
    %v839 = vadd.f32 0.0, %v838
    %v840 = vpop.f32.mrb[0].mxu0
    %841 = vdwg.mxu0
    %v842 = vpack.c.bf16 %v831, %v828
    %v843 = vpack.c.bf16 %v839, %v836
    %v844 = vld [vmem:[%s4] sm:$0xf]
    %v845 = vld [vmem:[%s4 + $0x4] sm:$0xf]
    %v846 = vld [vmem:[%s4 + $0x8] sm:$0xf]
    %v847 = vld [vmem:[%s4 + $0xc] sm:$0xf]
    %v848 = vld [vmem:[%s4 + $0x10] sm:$0xf]
    %v849 = vld [vmem:[%s4 + $0x14] sm:$0xf]
    %v850 = vld [vmem:[%s4 + $0x18] sm:$0xf]
    %v851 = vld [vmem:[%s4 + $0x1c] sm:$0xf]
    %v852 = vld [vmem:[%s4 + $0x20] sm:$0xf]
    %v853 = vld [vmem:[%s4 + $0x24] sm:$0xf]
    %v854 = vld [vmem:[%s4 + $0x28] sm:$0xf]
    %v855 = vld [vmem:[%s4 + $0x2c] sm:$0xf]
    %v856 = vld [vmem:[%s4 + $0x30] sm:$0xf]
    %v857 = vld [vmem:[%s4 + $0x34] sm:$0xf]
    %v858 = vld [vmem:[%s4 + $0x38] sm:$0xf]
    %v859 = vld [vmem:[%s4 + $0x3c] sm:$0xf]
    %s860 = scalar_lea.vmem %s5, 16
    %v861 = vld [vmem:[%s860] sm:$0xf]
    %v862 = vld [vmem:[%s860 + $0x4] sm:$0xf]
    %v863 = vld [vmem:[%s860 + $0x8] sm:$0xf]
    %v864 = vld [vmem:[%s860 + $0xc] sm:$0xf]
    %v869 = vunpack.c.l.b16 %v861
    %v870 = vunpack.c.l.b16 %v862
    %v871 = vunpack.c.l.b16 %v863
    %v872 = vunpack.c.l.b16 %v864
    %v873 = vpack.c.b16 %v870, %v869
    %v874 = vpack.c.b16 %v872, %v871
    %v876 = vsel %vm114, %v873, 0
    %v879 = vsel %vm114, %v874, 0
    %881 = vmatprep.subr.bf16.mxu0 0
    %882 = vmatpush1.bf16.msra.mxu0 %v769
    %883 = vmatprep.subr.bf16.mxu0 0
    %884 = vmatpush1.bf16.msra.mxu0 %v770
    %885 = vmatprep.subr.bf16.mxu0 0
    %886 = vmatpush1.bf16.msra.mxu0 %v771
    %887 = vmatprep.subr.bf16.mxu0 0
    %888 = vmatpush1.bf16.msra.mxu0 %v772
    %889 = vmatprep.subr.bf16.mxu0 0
    %890 = vmatpush1.bf16.msra.mxu0 0
    %891 = vmatprep.subr.bf16.mxu0 0
    %892 = vmatpush1.bf16.msra.mxu0 0
    %893 = vmatprep.subr.bf16.mxu0 0
    %894 = vmatpush1.bf16.msra.mxu0 0
    %895 = vmatprep.subr.bf16.mxu0 0
    %896 = vmatpush1.bf16.msra.mxu0 0
    %897 = vmatprep.subr.bf16.mxu0 0
    %898 = vmatpush1.bf16.msra.mxu0 0
    %899 = vmatprep.subr.bf16.mxu0 0
    %900 = vmatpush1.bf16.msra.mxu0 0
    %901 = vmatprep.subr.bf16.mxu0 0
    %902 = vmatpush1.bf16.msra.mxu0 0
    %903 = vmatprep.subr.bf16.mxu0 0
    %904 = vmatpush1.bf16.msra.mxu0 0
    %905 = vmatprep.subr.bf16.mxu0 0
    %906 = vmatpush1.bf16.msra.mxu0 0
    %907 = vmatprep.subr.bf16.mxu0 0
    %908 = vmatpush1.bf16.msra.mxu0 0
    %909 = vmatprep.subr.bf16.mxu0 0
    %910 = vmatpush1.bf16.msra.mxu0 0
    %911 = vmatprep.subr.bf16.mxu0 0
    %912 = vmatpush1.bf16.msra.mxu0 0
    %913 = vmatprep.mubr.bf16.mxu0 0
    %914 = vmatmul.mubr.bf16.gmra.mrb[0].mxu0 %v876
    %v915 = vpop.f32.mrb[0].mxu0
    %v916 = vadd.f32 0.0, %v915
    %v917 = vpop.f32.mrb[0].mxu0
    %v918 = vpop.f32.mrb[0].mxu0
    %v919 = vadd.f32 0.0, %v918
    %v920 = vpop.f32.mrb[0].mxu0
    %921 = vmatprep.mubr.bf16.mxu0 0
    %922 = vmatmul.mubr.bf16.gmra.mrb[0].mxu0 %v879
    %v923 = vpop.f32.mrb[0].mxu0
    %v924 = vadd.f32 0.0, %v923
    %v925 = vpop.f32.mrb[0].mxu0
    %v926 = vpop.f32.mrb[0].mxu0
    %v927 = vadd.f32 0.0, %v926
    %v928 = vpop.f32.mrb[0].mxu0
    %929 = vdwg.mxu0
    %v930 = vpack.c.bf16 %v919, %v916
    %v931 = vpack.c.bf16 %v927, %v924
    %s932 = scalar_lea.vmem %s4, 64
    %v933 = vld [vmem:[%s932] sm:$0xf]
    %v934 = vld [vmem:[%s932 + $0x4] sm:$0xf]
    %v935 = vld [vmem:[%s932 + $0x8] sm:$0xf]
    %v936 = vld [vmem:[%s932 + $0xc] sm:$0xf]
    %v937 = vld [vmem:[%s932 + $0x10] sm:$0xf]
    %v938 = vld [vmem:[%s932 + $0x14] sm:$0xf]
    %v939 = vld [vmem:[%s932 + $0x18] sm:$0xf]
    %v940 = vld [vmem:[%s932 + $0x1c] sm:$0xf]
    %v941 = vld [vmem:[%s932 + $0x20] sm:$0xf]
    %v942 = vld [vmem:[%s932 + $0x24] sm:$0xf]
    %v943 = vld [vmem:[%s932 + $0x28] sm:$0xf]
    %v944 = vld [vmem:[%s932 + $0x2c] sm:$0xf]
    %v945 = vld [vmem:[%s932 + $0x30] sm:$0xf]
    %v946 = vld [vmem:[%s932 + $0x34] sm:$0xf]
    %v947 = vld [vmem:[%s932 + $0x38] sm:$0xf]
    %v948 = vld [vmem:[%s932 + $0x3c] sm:$0xf]
    %v965 = vunpack.c.l.b16 %v933
    %v966 = vunpack.c.l.b16 %v934
    %v967 = vunpack.c.l.b16 %v935
    %v968 = vunpack.c.l.b16 %v936
    %v969 = vunpack.c.l.b16 %v937
    %v970 = vunpack.c.l.b16 %v938
    %v971 = vunpack.c.l.b16 %v939
    %v972 = vunpack.c.l.b16 %v940
    %v973 = vunpack.c.l.b16 %v941
    %v974 = vunpack.c.l.b16 %v942
    %v975 = vunpack.c.l.b16 %v943
    %v976 = vunpack.c.l.b16 %v944
    %v977 = vunpack.c.l.b16 %v945
    %v978 = vunpack.c.l.b16 %v946
    %v979 = vunpack.c.l.b16 %v947
    %v980 = vunpack.c.l.b16 %v948
    %v981 = vpack.c.b16 %v966, %v965
    %v982 = vpack.c.b16 %v968, %v967
    %v983 = vpack.c.b16 %v970, %v969
    %v984 = vpack.c.b16 %v972, %v971
    %v985 = vpack.c.b16 %v974, %v973
    %v986 = vpack.c.b16 %v976, %v975
    %v987 = vpack.c.b16 %v978, %v977
    %v988 = vpack.c.b16 %v980, %v979
    %997 = vmatprep.subr.bf16.mxu0 0
    %998 = vmatpush1.bf16.msra.mxu0 %v981
    %999 = vmatprep.subr.bf16.mxu0 0
    %1000 = vmatpush1.bf16.msra.mxu0 %v982
    %1001 = vmatprep.subr.bf16.mxu0 0
    %1002 = vmatpush1.bf16.msra.mxu0 %v983
    %1003 = vmatprep.subr.bf16.mxu0 0
    %1004 = vmatpush1.bf16.msra.mxu0 %v984
    %1005 = vmatprep.subr.bf16.mxu0 0
    %1006 = vmatpush1.bf16.msra.mxu0 %v985
    %1007 = vmatprep.subr.bf16.mxu0 0
    %1008 = vmatpush1.bf16.msra.mxu0 %v986
    %1009 = vmatprep.subr.bf16.mxu0 0
    %1010 = vmatpush1.bf16.msra.mxu0 %v987
    %1011 = vmatprep.subr.bf16.mxu0 0
    %1012 = vmatpush1.bf16.msra.mxu0 %v988
    %1013 = vmatprep.subr.bf16.mxu0 0
    %1014 = vmatpush1.bf16.msra.mxu0 0
    %1015 = vmatprep.subr.bf16.mxu0 0
    %1016 = vmatpush1.bf16.msra.mxu0 0
    %1017 = vmatprep.subr.bf16.mxu0 0
    %1018 = vmatpush1.bf16.msra.mxu0 0
    %1019 = vmatprep.subr.bf16.mxu0 0
    %1020 = vmatpush1.bf16.msra.mxu0 0
    %1021 = vmatprep.subr.bf16.mxu0 0
    %1022 = vmatpush1.bf16.msra.mxu0 0
    %1023 = vmatprep.subr.bf16.mxu0 0
    %1024 = vmatpush1.bf16.msra.mxu0 0
    %1025 = vmatprep.subr.bf16.mxu0 0
    %1026 = vmatpush1.bf16.msra.mxu0 0
    %1027 = vmatprep.subr.bf16.mxu0 0
    %1028 = vmatpush1.bf16.msra.mxu0 0
    %1029 = vmatprep.mubr.bf16.mxu0 0
    %1030 = vmatmul.mubr.bf16.gmra.mrb[0].mxu0 %v930
    %v1031 = vpop.f32.mrb[0].mxu0
    %v1032 = vadd.f32 0.0, %v1031
    %v1033 = vpop.f32.mrb[0].mxu0
    %v1034 = vpop.f32.mrb[0].mxu0
    %v1035 = vadd.f32 0.0, %v1034
    %v1036 = vpop.f32.mrb[0].mxu0
    %1037 = vmatprep.mubr.bf16.mxu0 0
    %1038 = vmatmul.mubr.bf16.gmra.mrb[0].mxu0 %v931
    %v1039 = vpop.f32.mrb[0].mxu0
    %v1040 = vadd.f32 0.0, %v1039
    %v1041 = vpop.f32.mrb[0].mxu0
    %v1042 = vpop.f32.mrb[0].mxu0
    %v1043 = vadd.f32 0.0, %v1042
    %v1044 = vpop.f32.mrb[0].mxu0
    %1045 = vdwg.mxu0
    %v1062 = vunpack.c.l.b16 %v844
    %v1063 = vunpack.c.l.b16 %v845
    %v1064 = vunpack.c.l.b16 %v846
    %v1065 = vunpack.c.l.b16 %v847
    %v1066 = vunpack.c.l.b16 %v848
    %v1067 = vunpack.c.l.b16 %v849
    %v1068 = vunpack.c.l.b16 %v850
    %v1069 = vunpack.c.l.b16 %v851
    %v1070 = vunpack.c.l.b16 %v852
    %v1071 = vunpack.c.l.b16 %v853
    %v1072 = vunpack.c.l.b16 %v854
    %v1073 = vunpack.c.l.b16 %v855
    %v1074 = vunpack.c.l.b16 %v856
    %v1075 = vunpack.c.l.b16 %v857
    %v1076 = vunpack.c.l.b16 %v858
    %v1077 = vunpack.c.l.b16 %v859
    %v1078 = vpack.c.b16 %v1063, %v1062
    %v1079 = vpack.c.b16 %v1065, %v1064
    %v1080 = vpack.c.b16 %v1067, %v1066
    %v1081 = vpack.c.b16 %v1069, %v1068
    %v1082 = vpack.c.b16 %v1071, %v1070
    %v1083 = vpack.c.b16 %v1073, %v1072
    %v1084 = vpack.c.b16 %v1075, %v1074
    %v1085 = vpack.c.b16 %v1077, %v1076
    %1094 = vmatprep.subr.bf16.mxu0 0
    %1095 = vmatpush1.bf16.msra.mxu0 %v1078
    %1096 = vmatprep.subr.bf16.mxu0 0
    %1097 = vmatpush1.bf16.msra.mxu0 %v1079
    %1098 = vmatprep.subr.bf16.mxu0 0
    %1099 = vmatpush1.bf16.msra.mxu0 %v1080
    %1100 = vmatprep.subr.bf16.mxu0 0
    %1101 = vmatpush1.bf16.msra.mxu0 %v1081
    %1102 = vmatprep.subr.bf16.mxu0 0
    %1103 = vmatpush1.bf16.msra.mxu0 %v1082
    %1104 = vmatprep.subr.bf16.mxu0 0
    %1105 = vmatpush1.bf16.msra.mxu0 %v1083
    %1106 = vmatprep.subr.bf16.mxu0 0
    %1107 = vmatpush1.bf16.msra.mxu0 %v1084
    %1108 = vmatprep.subr.bf16.mxu0 0
    %1109 = vmatpush1.bf16.msra.mxu0 %v1085
    %1110 = vmatprep.subr.bf16.mxu0 0
    %1111 = vmatpush1.bf16.msra.mxu0 0
    %1112 = vmatprep.subr.bf16.mxu0 0
    %1113 = vmatpush1.bf16.msra.mxu0 0
    %1114 = vmatprep.subr.bf16.mxu0 0
    %1115 = vmatpush1.bf16.msra.mxu0 0
    %1116 = vmatprep.subr.bf16.mxu0 0
    %1117 = vmatpush1.bf16.msra.mxu0 0
    %1118 = vmatprep.subr.bf16.mxu0 0
    %1119 = vmatpush1.bf16.msra.mxu0 0
    %1120 = vmatprep.subr.bf16.mxu0 0
    %1121 = vmatpush1.bf16.msra.mxu0 0
    %1122 = vmatprep.subr.bf16.mxu0 0
    %1123 = vmatpush1.bf16.msra.mxu0 0
    %1124 = vmatprep.subr.bf16.mxu0 0
    %1125 = vmatpush1.bf16.msra.mxu0 0
    %1126 = vmatprep.mubr.bf16.mxu0 0
    %1127 = vmatmul.mubr.bf16.gmra.mrb[0].mxu0 %v842
    %v1128 = vpop.f32.mrb[0].mxu0
    %v1129 = vadd.f32 %v1032, %v1128
    %v1130 = vpop.f32.mrb[0].mxu0
    %v1131 = vpop.f32.mrb[0].mxu0
    %v1132 = vadd.f32 %v1035, %v1131
    %v1133 = vpop.f32.mrb[0].mxu0
    %1134 = vmatprep.mubr.bf16.mxu0 0
    %1135 = vmatmul.mubr.bf16.gmra.mrb[0].mxu0 %v843
    %v1136 = vpop.f32.mrb[0].mxu0
    %v1137 = vadd.f32 %v1040, %v1136
    %v1138 = vpop.f32.mrb[0].mxu0
    %v1139 = vpop.f32.mrb[0].mxu0
    %v1140 = vadd.f32 %v1043, %v1139
    %v1141 = vpop.f32.mrb[0].mxu0
    %1142 = vdwg.mxu0
    %s1143 = scalar_lea.vmem %s5, 32
    %v1144 = vld [vmem:[%s1143] sm:$0xf]
    %v1145 = vld [vmem:[%s1143 + $0x4] sm:$0xf]
    %v1146 = vld [vmem:[%s1143 + $0x8] sm:$0xf]
    %v1147 = vld [vmem:[%s1143 + $0xc] sm:$0xf]
    %v1152 = vunpack.c.l.b16 %v1144
    %v1153 = vunpack.c.l.b16 %v1145
    %v1154 = vunpack.c.l.b16 %v1146
    %v1155 = vunpack.c.l.b16 %v1147
    %v1156 = vpack.c.b16 %v1153, %v1152
    %v1157 = vpack.c.b16 %v1155, %v1154
    %v1159 = vsel %vm114, %v1156, 0
    %v1162 = vsel %vm114, %v1157, 0
    %1164 = vmatprep.subr.bf16.mxu0 0
    %1165 = vmatpush1.bf16.msra.mxu0 %v769
    %1166 = vmatprep.subr.bf16.mxu0 0
    %1167 = vmatpush1.bf16.msra.mxu0 %v770
    %1168 = vmatprep.subr.bf16.mxu0 0
    %1169 = vmatpush1.bf16.msra.mxu0 %v771
    %1170 = vmatprep.subr.bf16.mxu0 0
    %1171 = vmatpush1.bf16.msra.mxu0 %v772
    %1172 = vmatprep.subr.bf16.mxu0 0
    %1173 = vmatpush1.bf16.msra.mxu0 0
    %1174 = vmatprep.subr.bf16.mxu0 0
    %1175 = vmatpush1.bf16.msra.mxu0 0
    %1176 = vmatprep.subr.bf16.mxu0 0
    %1177 = vmatpush1.bf16.msra.mxu0 0
    %1178 = vmatprep.subr.bf16.mxu0 0
    %1179 = vmatpush1.bf16.msra.mxu0 0
    %1180 = vmatprep.subr.bf16.mxu0 0
    %1181 = vmatpush1.bf16.msra.mxu0 0
    %1182 = vmatprep.subr.bf16.mxu0 0
    %1183 = vmatpush1.bf16.msra.mxu0 0
    %1184 = vmatprep.subr.bf16.mxu0 0
    %1185 = vmatpush1.bf16.msra.mxu0 0
    %1186 = vmatprep.subr.bf16.mxu0 0
    %1187 = vmatpush1.bf16.msra.mxu0 0
    %1188 = vmatprep.subr.bf16.mxu0 0
    %1189 = vmatpush1.bf16.msra.mxu0 0
    %1190 = vmatprep.subr.bf16.mxu0 0
    %1191 = vmatpush1.bf16.msra.mxu0 0
    %1192 = vmatprep.subr.bf16.mxu0 0
    %1193 = vmatpush1.bf16.msra.mxu0 0
    %1194 = vmatprep.subr.bf16.mxu0 0
    %1195 = vmatpush1.bf16.msra.mxu0 0
    %1196 = vmatprep.mubr.bf16.mxu0 0
    %1197 = vmatmul.mubr.bf16.gmra.mrb[0].mxu0 %v1159
    %v1198 = vpop.f32.mrb[0].mxu0
    %v1199 = vadd.f32 0.0, %v1198
    %v1200 = vpop.f32.mrb[0].mxu0
    %v1201 = vpop.f32.mrb[0].mxu0
    %v1202 = vadd.f32 0.0, %v1201
    %v1203 = vpop.f32.mrb[0].mxu0
    %1204 = vmatprep.mubr.bf16.mxu0 0
    %1205 = vmatmul.mubr.bf16.gmra.mrb[0].mxu0 %v1162
    %v1206 = vpop.f32.mrb[0].mxu0
    %v1207 = vadd.f32 0.0, %v1206
    %v1208 = vpop.f32.mrb[0].mxu0
    %v1209 = vpop.f32.mrb[0].mxu0
    %v1210 = vadd.f32 0.0, %v1209
    %v1211 = vpop.f32.mrb[0].mxu0
    %1212 = vdwg.mxu0
    %v1213 = vpack.c.bf16 %v1202, %v1199
    %v1214 = vpack.c.bf16 %v1210, %v1207
    %s1215 = scalar_lea.vmem %s4, 128
    %v1216 = vld [vmem:[%s1215] sm:$0xf]
    %v1217 = vld [vmem:[%s1215 + $0x4] sm:$0xf]
    %v1218 = vld [vmem:[%s1215 + $0x8] sm:$0xf]
    %v1219 = vld [vmem:[%s1215 + $0xc] sm:$0xf]
    %v1220 = vld [vmem:[%s1215 + $0x10] sm:$0xf]
    %v1221 = vld [vmem:[%s1215 + $0x14] sm:$0xf]
    %v1222 = vld [vmem:[%s1215 + $0x18] sm:$0xf]
    %v1223 = vld [vmem:[%s1215 + $0x1c] sm:$0xf]
    %v1224 = vld [vmem:[%s1215 + $0x20] sm:$0xf]
    %v1225 = vld [vmem:[%s1215 + $0x24] sm:$0xf]
    %v1226 = vld [vmem:[%s1215 + $0x28] sm:$0xf]
    %v1227 = vld [vmem:[%s1215 + $0x2c] sm:$0xf]
    %v1228 = vld [vmem:[%s1215 + $0x30] sm:$0xf]
    %v1229 = vld [vmem:[%s1215 + $0x34] sm:$0xf]
    %v1230 = vld [vmem:[%s1215 + $0x38] sm:$0xf]
    %v1231 = vld [vmem:[%s1215 + $0x3c] sm:$0xf]
    %v1248 = vunpack.c.l.b16 %v1216
    %v1249 = vunpack.c.l.b16 %v1217
    %v1250 = vunpack.c.l.b16 %v1218
    %v1251 = vunpack.c.l.b16 %v1219
    %v1252 = vunpack.c.l.b16 %v1220
    %v1253 = vunpack.c.l.b16 %v1221
    %v1254 = vunpack.c.l.b16 %v1222
    %v1255 = vunpack.c.l.b16 %v1223
    %v1256 = vunpack.c.l.b16 %v1224
    %v1257 = vunpack.c.l.b16 %v1225
    %v1258 = vunpack.c.l.b16 %v1226
    %v1259 = vunpack.c.l.b16 %v1227
    %v1260 = vunpack.c.l.b16 %v1228
    %v1261 = vunpack.c.l.b16 %v1229
    %v1262 = vunpack.c.l.b16 %v1230
    %v1263 = vunpack.c.l.b16 %v1231
    %v1264 = vpack.c.b16 %v1249, %v1248
    %v1265 = vpack.c.b16 %v1251, %v1250
    %v1266 = vpack.c.b16 %v1253, %v1252
    %v1267 = vpack.c.b16 %v1255, %v1254
    %v1268 = vpack.c.b16 %v1257, %v1256
    %v1269 = vpack.c.b16 %v1259, %v1258
    %v1270 = vpack.c.b16 %v1261, %v1260
    %v1271 = vpack.c.b16 %v1263, %v1262
    %1280 = vmatprep.subr.bf16.mxu0 0
    %1281 = vmatpush1.bf16.msra.mxu0 %v1264
    %1282 = vmatprep.subr.bf16.mxu0 0
    %1283 = vmatpush1.bf16.msra.mxu0 %v1265
    %1284 = vmatprep.subr.bf16.mxu0 0
    %1285 = vmatpush1.bf16.msra.mxu0 %v1266
    %1286 = vmatprep.subr.bf16.mxu0 0
    %1287 = vmatpush1.bf16.msra.mxu0 %v1267
    %1288 = vmatprep.subr.bf16.mxu0 0
    %1289 = vmatpush1.bf16.msra.mxu0 %v1268
    %1290 = vmatprep.subr.bf16.mxu0 0
    %1291 = vmatpush1.bf16.msra.mxu0 %v1269
    %1292 = vmatprep.subr.bf16.mxu0 0
    %1293 = vmatpush1.bf16.msra.mxu0 %v1270
    %1294 = vmatprep.subr.bf16.mxu0 0
    %1295 = vmatpush1.bf16.msra.mxu0 %v1271
    %1296 = vmatprep.subr.bf16.mxu0 0
    %1297 = vmatpush1.bf16.msra.mxu0 0
    %1298 = vmatprep.subr.bf16.mxu0 0
    %1299 = vmatpush1.bf16.msra.mxu0 0
    %1300 = vmatprep.subr.bf16.mxu0 0
    %1301 = vmatpush1.bf16.msra.mxu0 0
    %1302 = vmatprep.subr.bf16.mxu0 0
    %1303 = vmatpush1.bf16.msra.mxu0 0
    %1304 = vmatprep.subr.bf16.mxu0 0
    %1305 = vmatpush1.bf16.msra.mxu0 0
    %1306 = vmatprep.subr.bf16.mxu0 0
    %1307 = vmatpush1.bf16.msra.mxu0 0
    %1308 = vmatprep.subr.bf16.mxu0 0
    %1309 = vmatpush1.bf16.msra.mxu0 0
    %1310 = vmatprep.subr.bf16.mxu0 0
    %1311 = vmatpush1.bf16.msra.mxu0 0
    %1312 = vmatprep.mubr.bf16.mxu0 0
    %1313 = vmatmul.mubr.bf16.gmra.mrb[0].mxu0 %v1213
    %v1314 = vpop.f32.mrb[0].mxu0
    %v1315 = vadd.f32 0.0, %v1314
    %v1316 = vpop.f32.mrb[0].mxu0
    %v1317 = vpop.f32.mrb[0].mxu0
    %v1318 = vadd.f32 0.0, %v1317
    %v1319 = vpop.f32.mrb[0].mxu0
    %1320 = vmatprep.mubr.bf16.mxu0 0
    %1321 = vmatmul.mubr.bf16.gmra.mrb[0].mxu0 %v1214
    %v1322 = vpop.f32.mrb[0].mxu0
    %v1323 = vadd.f32 0.0, %v1322
    %v1324 = vpop.f32.mrb[0].mxu0
    %v1325 = vpop.f32.mrb[0].mxu0
    %v1326 = vadd.f32 0.0, %v1325
    %v1327 = vpop.f32.mrb[0].mxu0
    %1328 = vdwg.mxu0
    %v1329 = vadd.f32 %v1129, %v1315
    %v1330 = vadd.f32 %v1132, %v1318
    %v1331 = vadd.f32 %v1137, %v1323
    %v1332 = vadd.f32 %v1140, %v1326
    %v1333 = vld [vmem:[%s6] sm:$0x1]
    %v1335 = vlaneseq
    %v1336 = vshrl.u32 %v1335, 7
    %v1337 = vsub.s32 0, %v1336
    %v1338 = vrot.slane %v1333, %v1337
    %v1340 = vadd.f32 %v1329, %v1338
    %v1341 = vadd.f32 %v1330, %v1338
    %v1342 = vadd.f32 %v1331, %v1338
    %v1343 = vadd.f32 %v1332, %v1338
    %vm1344 = vcmp.ge.f32.partialorder %v1340, 0.0
    %vm1345 = vcmp.ge.f32.partialorder %v1341, 0.0
    %vm1346 = vcmp.ge.f32.partialorder %v1342, 0.0
    %vm1347 = vcmp.ge.f32.partialorder %v1343, 0.0
    %v1348 = vmul.f32 %v1340, 0.2
    %v1349 = vmul.f32 %v1341, 0.2
    %v1350 = vmul.f32 %v1342, 0.2
    %v1351 = vmul.f32 %v1343, 0.2
    %v1352 = vsel %vm1344, %v1340, %v1348
    %v1353 = vsel %vm1345, %v1341, %v1349
    %v1354 = vsel %vm1346, %v1342, %v1350
    %v1355 = vsel %vm1347, %v1343, %v1351
    %v1356 = vpack.c.bf16 %v1353, %v1352
    %v1357 = vpack.c.bf16 %v1355, %v1354
    %v1358 = vld [vmem:[%s8] sm:$0xf]
    %v1359 = vld [vmem:[%s8 + $0x4] sm:$0xf]
    %v1362 = vunpack.c.l.b16 %v1358
    %v1363 = vunpack.c.l.b16 %v1359
    %v1364 = vpack.c.b16 %v1363, %v1362
    %vm1365 = vcmask 261120
    %v1367 = vsel %vm1365, %v1364, 0
    %1369 = vmatprep.subr.bf16.mxu0 0
    %1370 = vmatpush1.bf16.msra.mxu0 %v1356
    %1371 = vmatprep.subr.bf16.mxu0 0
    %1372 = vmatpush1.bf16.msra.mxu0 %v1357
    %1373 = vmatprep.subr.bf16.mxu0 0
    %1374 = vmatpush1.bf16.msra.mxu0 0
    %1375 = vmatprep.subr.bf16.mxu0 0
    %1376 = vmatpush1.bf16.msra.mxu0 0
    %1377 = vmatprep.subr.bf16.mxu0 0
    %1378 = vmatpush1.bf16.msra.mxu0 0
    %1379 = vmatprep.subr.bf16.mxu0 0
    %1380 = vmatpush1.bf16.msra.mxu0 0
    %1381 = vmatprep.subr.bf16.mxu0 0
    %1382 = vmatpush1.bf16.msra.mxu0 0
    %1383 = vmatprep.subr.bf16.mxu0 0
    %1384 = vmatpush1.bf16.msra.mxu0 0
    %1385 = vmatprep.subr.bf16.mxu0 0
    %1386 = vmatpush1.bf16.msra.mxu0 0
    %1387 = vmatprep.subr.bf16.mxu0 0
    %1388 = vmatpush1.bf16.msra.mxu0 0
    %1389 = vmatprep.subr.bf16.mxu0 0
    %1390 = vmatpush1.bf16.msra.mxu0 0
    %1391 = vmatprep.subr.bf16.mxu0 0
    %1392 = vmatpush1.bf16.msra.mxu0 0
    %1393 = vmatprep.subr.bf16.mxu0 0
    %1394 = vmatpush1.bf16.msra.mxu0 0
    %1395 = vmatprep.subr.bf16.mxu0 0
    %1396 = vmatpush1.bf16.msra.mxu0 0
    %1397 = vmatprep.subr.bf16.mxu0 0
    %1398 = vmatpush1.bf16.msra.mxu0 0
    %1399 = vmatprep.subr.bf16.mxu0 0
    %1400 = vmatpush1.bf16.msra.mxu0 0
    %1401 = vmatprep.mubr.bf16.mxu0 0
    %1402 = vmatmul.mubr.bf16.gmra.mrb[0].mxu0 %v1367
    %v1403 = vpop.f32.mrb[0].mxu0
    %v1404 = vadd.f32 0.0, %v1403
    %v1405 = vpop.f32.mrb[0].mxu0
    %v1406 = vpop.f32.mrb[0].mxu0
    %v1407 = vadd.f32 0.0, %v1406
    %v1408 = vpop.f32.mrb[0].mxu0
    %1409 = vdwg.mxu0
    %v1410 = vpack.c.bf16 %v1407, %v1404
    %v1411 = vld [vmem:[%s7] sm:$0xf]
    %v1412 = vld [vmem:[%s7 + $0x4] sm:$0xf]
    %v1413 = vld [vmem:[%s7 + $0x8] sm:$0xf]
    %v1414 = vld [vmem:[%s7 + $0xc] sm:$0xf]
    %v1415 = vld [vmem:[%s7 + $0x10] sm:$0xf]
    %v1416 = vld [vmem:[%s7 + $0x14] sm:$0xf]
    %v1417 = vld [vmem:[%s7 + $0x18] sm:$0xf]
    %v1418 = vld [vmem:[%s7 + $0x1c] sm:$0xf]
    %v1419 = vld [vmem:[%s7 + $0x20] sm:$0xf]
    %v1420 = vld [vmem:[%s7 + $0x24] sm:$0xf]
    %v1421 = vld [vmem:[%s7 + $0x28] sm:$0xf]
    %v1422 = vld [vmem:[%s7 + $0x2c] sm:$0xf]
    %v1423 = vld [vmem:[%s7 + $0x30] sm:$0xf]
    %v1424 = vld [vmem:[%s7 + $0x34] sm:$0xf]
    %v1425 = vld [vmem:[%s7 + $0x38] sm:$0xf]
    %v1426 = vld [vmem:[%s7 + $0x3c] sm:$0xf]
    %s1427 = scalar_lea.vmem %s8, 8
    %v1428 = vld [vmem:[%s1427] sm:$0xf]
    %v1429 = vld [vmem:[%s1427 + $0x4] sm:$0xf]
    %v1432 = vunpack.c.l.b16 %v1428
    %v1433 = vunpack.c.l.b16 %v1429
    %v1434 = vpack.c.b16 %v1433, %v1432
    %v1436 = vsel %vm1365, %v1434, 0
    %1438 = vmatprep.subr.bf16.mxu0 0
    %1439 = vmatpush1.bf16.msra.mxu0 %v1356
    %1440 = vmatprep.subr.bf16.mxu0 0
    %1441 = vmatpush1.bf16.msra.mxu0 %v1357
    %1442 = vmatprep.subr.bf16.mxu0 0
    %1443 = vmatpush1.bf16.msra.mxu0 0
    %1444 = vmatprep.subr.bf16.mxu0 0
    %1445 = vmatpush1.bf16.msra.mxu0 0
    %1446 = vmatprep.subr.bf16.mxu0 0
    %1447 = vmatpush1.bf16.msra.mxu0 0
    %1448 = vmatprep.subr.bf16.mxu0 0
    %1449 = vmatpush1.bf16.msra.mxu0 0
    %1450 = vmatprep.subr.bf16.mxu0 0
    %1451 = vmatpush1.bf16.msra.mxu0 0
    %1452 = vmatprep.subr.bf16.mxu0 0
    %1453 = vmatpush1.bf16.msra.mxu0 0
    %1454 = vmatprep.subr.bf16.mxu0 0
    %1455 = vmatpush1.bf16.msra.mxu0 0
    %1456 = vmatprep.subr.bf16.mxu0 0
    %1457 = vmatpush1.bf16.msra.mxu0 0
    %1458 = vmatprep.subr.bf16.mxu0 0
    %1459 = vmatpush1.bf16.msra.mxu0 0
    %1460 = vmatprep.subr.bf16.mxu0 0
    %1461 = vmatpush1.bf16.msra.mxu0 0
    %1462 = vmatprep.subr.bf16.mxu0 0
    %1463 = vmatpush1.bf16.msra.mxu0 0
    %1464 = vmatprep.subr.bf16.mxu0 0
    %1465 = vmatpush1.bf16.msra.mxu0 0
    %1466 = vmatprep.subr.bf16.mxu0 0
    %1467 = vmatpush1.bf16.msra.mxu0 0
    %1468 = vmatprep.subr.bf16.mxu0 0
    %1469 = vmatpush1.bf16.msra.mxu0 0
    %1470 = vmatprep.mubr.bf16.mxu0 0
    %1471 = vmatmul.mubr.bf16.gmra.mrb[0].mxu0 %v1436
    %v1472 = vpop.f32.mrb[0].mxu0
    %v1473 = vadd.f32 0.0, %v1472
    %v1474 = vpop.f32.mrb[0].mxu0
    %v1475 = vpop.f32.mrb[0].mxu0
    %v1476 = vadd.f32 0.0, %v1475
    %v1477 = vpop.f32.mrb[0].mxu0
    %1478 = vdwg.mxu0
    %v1479 = vpack.c.bf16 %v1476, %v1473
    %s1480 = scalar_lea.vmem %s7, 64
    %v1481 = vld [vmem:[%s1480] sm:$0xf]
    %v1482 = vld [vmem:[%s1480 + $0x4] sm:$0xf]
    %v1483 = vld [vmem:[%s1480 + $0x8] sm:$0xf]
    %v1484 = vld [vmem:[%s1480 + $0xc] sm:$0xf]
    %v1485 = vld [vmem:[%s1480 + $0x10] sm:$0xf]
    %v1486 = vld [vmem:[%s1480 + $0x14] sm:$0xf]
    %v1487 = vld [vmem:[%s1480 + $0x18] sm:$0xf]
    %v1488 = vld [vmem:[%s1480 + $0x1c] sm:$0xf]
    %v1489 = vld [vmem:[%s1480 + $0x20] sm:$0xf]
    %v1490 = vld [vmem:[%s1480 + $0x24] sm:$0xf]
    %v1491 = vld [vmem:[%s1480 + $0x28] sm:$0xf]
    %v1492 = vld [vmem:[%s1480 + $0x2c] sm:$0xf]
    %v1493 = vld [vmem:[%s1480 + $0x30] sm:$0xf]
    %v1494 = vld [vmem:[%s1480 + $0x34] sm:$0xf]
    %v1495 = vld [vmem:[%s1480 + $0x38] sm:$0xf]
    %v1496 = vld [vmem:[%s1480 + $0x3c] sm:$0xf]
    %v1513 = vunpack.c.l.b16 %v1481
    %v1514 = vunpack.c.l.b16 %v1482
    %v1515 = vunpack.c.l.b16 %v1483
    %v1516 = vunpack.c.l.b16 %v1484
    %v1517 = vunpack.c.l.b16 %v1485
    %v1518 = vunpack.c.l.b16 %v1486
    %v1519 = vunpack.c.l.b16 %v1487
    %v1520 = vunpack.c.l.b16 %v1488
    %v1521 = vunpack.c.l.b16 %v1489
    %v1522 = vunpack.c.l.b16 %v1490
    %v1523 = vunpack.c.l.b16 %v1491
    %v1524 = vunpack.c.l.b16 %v1492
    %v1525 = vunpack.c.l.b16 %v1493
    %v1526 = vunpack.c.l.b16 %v1494
    %v1527 = vunpack.c.l.b16 %v1495
    %v1528 = vunpack.c.l.b16 %v1496
    %v1529 = vpack.c.b16 %v1514, %v1513
    %v1530 = vpack.c.b16 %v1516, %v1515
    %v1531 = vpack.c.b16 %v1518, %v1517
    %v1532 = vpack.c.b16 %v1520, %v1519
    %v1533 = vpack.c.b16 %v1522, %v1521
    %v1534 = vpack.c.b16 %v1524, %v1523
    %v1535 = vpack.c.b16 %v1526, %v1525
    %v1536 = vpack.c.b16 %v1528, %v1527
    %1545 = vmatprep.subr.bf16.mxu0 0
    %1546 = vmatpush1.bf16.msra.mxu0 %v1529
    %1547 = vmatprep.subr.bf16.mxu0 0
    %1548 = vmatpush1.bf16.msra.mxu0 %v1530
    %1549 = vmatprep.subr.bf16.mxu0 0
    %1550 = vmatpush1.bf16.msra.mxu0 %v1531
    %1551 = vmatprep.subr.bf16.mxu0 0
    %1552 = vmatpush1.bf16.msra.mxu0 %v1532
    %1553 = vmatprep.subr.bf16.mxu0 0
    %1554 = vmatpush1.bf16.msra.mxu0 %v1533
    %1555 = vmatprep.subr.bf16.mxu0 0
    %1556 = vmatpush1.bf16.msra.mxu0 %v1534
    %1557 = vmatprep.subr.bf16.mxu0 0
    %1558 = vmatpush1.bf16.msra.mxu0 %v1535
    %1559 = vmatprep.subr.bf16.mxu0 0
    %1560 = vmatpush1.bf16.msra.mxu0 %v1536
    %1561 = vmatprep.subr.bf16.mxu0 0
    %1562 = vmatpush1.bf16.msra.mxu0 0
    %1563 = vmatprep.subr.bf16.mxu0 0
    %1564 = vmatpush1.bf16.msra.mxu0 0
    %1565 = vmatprep.subr.bf16.mxu0 0
    %1566 = vmatpush1.bf16.msra.mxu0 0
    %1567 = vmatprep.subr.bf16.mxu0 0
    %1568 = vmatpush1.bf16.msra.mxu0 0
    %1569 = vmatprep.subr.bf16.mxu0 0
    %1570 = vmatpush1.bf16.msra.mxu0 0
    %1571 = vmatprep.subr.bf16.mxu0 0
    %1572 = vmatpush1.bf16.msra.mxu0 0
    %1573 = vmatprep.subr.bf16.mxu0 0
    %1574 = vmatpush1.bf16.msra.mxu0 0
    %1575 = vmatprep.subr.bf16.mxu0 0
    %1576 = vmatpush1.bf16.msra.mxu0 0
    %1577 = vmatprep.mubr.bf16.mxu0 0
    %1578 = vmatmul.mubr.bf16.gmra.mrb[0].mxu0 %v1479
    %v1579 = vpop.f32.mrb[0].mxu0
    %v1580 = vadd.f32 0.0, %v1579
    %v1581 = vpop.f32.mrb[0].mxu0
    %v1582 = vpop.f32.mrb[0].mxu0
    %v1583 = vadd.f32 0.0, %v1582
    %v1584 = vpop.f32.mrb[0].mxu0
    %1585 = vdwg.mxu0
    %v1602 = vunpack.c.l.b16 %v1411
    %v1603 = vunpack.c.l.b16 %v1412
    %v1604 = vunpack.c.l.b16 %v1413
    %v1605 = vunpack.c.l.b16 %v1414
    %v1606 = vunpack.c.l.b16 %v1415
    %v1607 = vunpack.c.l.b16 %v1416
    %v1608 = vunpack.c.l.b16 %v1417
    %v1609 = vunpack.c.l.b16 %v1418
    %v1610 = vunpack.c.l.b16 %v1419
    %v1611 = vunpack.c.l.b16 %v1420
    %v1612 = vunpack.c.l.b16 %v1421
    %v1613 = vunpack.c.l.b16 %v1422
    %v1614 = vunpack.c.l.b16 %v1423
    %v1615 = vunpack.c.l.b16 %v1424
    %v1616 = vunpack.c.l.b16 %v1425
    %v1617 = vunpack.c.l.b16 %v1426
    %v1618 = vpack.c.b16 %v1603, %v1602
    %v1619 = vpack.c.b16 %v1605, %v1604
    %v1620 = vpack.c.b16 %v1607, %v1606
    %v1621 = vpack.c.b16 %v1609, %v1608
    %v1622 = vpack.c.b16 %v1611, %v1610
    %v1623 = vpack.c.b16 %v1613, %v1612
    %v1624 = vpack.c.b16 %v1615, %v1614
    %v1625 = vpack.c.b16 %v1617, %v1616
    %1634 = vmatprep.subr.bf16.mxu0 0
    %1635 = vmatpush1.bf16.msra.mxu0 %v1618
    %1636 = vmatprep.subr.bf16.mxu0 0
    %1637 = vmatpush1.bf16.msra.mxu0 %v1619
    %1638 = vmatprep.subr.bf16.mxu0 0
    %1639 = vmatpush1.bf16.msra.mxu0 %v1620
    %1640 = vmatprep.subr.bf16.mxu0 0
    %1641 = vmatpush1.bf16.msra.mxu0 %v1621
    %1642 = vmatprep.subr.bf16.mxu0 0
    %1643 = vmatpush1.bf16.msra.mxu0 %v1622
    %1644 = vmatprep.subr.bf16.mxu0 0
    %1645 = vmatpush1.bf16.msra.mxu0 %v1623
    %1646 = vmatprep.subr.bf16.mxu0 0
    %1647 = vmatpush1.bf16.msra.mxu0 %v1624
    %1648 = vmatprep.subr.bf16.mxu0 0
    %1649 = vmatpush1.bf16.msra.mxu0 %v1625
    %1650 = vmatprep.subr.bf16.mxu0 0
    %1651 = vmatpush1.bf16.msra.mxu0 0
    %1652 = vmatprep.subr.bf16.mxu0 0
    %1653 = vmatpush1.bf16.msra.mxu0 0
    %1654 = vmatprep.subr.bf16.mxu0 0
    %1655 = vmatpush1.bf16.msra.mxu0 0
    %1656 = vmatprep.subr.bf16.mxu0 0
    %1657 = vmatpush1.bf16.msra.mxu0 0
    %1658 = vmatprep.subr.bf16.mxu0 0
    %1659 = vmatpush1.bf16.msra.mxu0 0
    %1660 = vmatprep.subr.bf16.mxu0 0
    %1661 = vmatpush1.bf16.msra.mxu0 0
    %1662 = vmatprep.subr.bf16.mxu0 0
    %1663 = vmatpush1.bf16.msra.mxu0 0
    %1664 = vmatprep.subr.bf16.mxu0 0
    %1665 = vmatpush1.bf16.msra.mxu0 0
    %1666 = vmatprep.mubr.bf16.mxu0 0
    %1667 = vmatmul.mubr.bf16.gmra.mrb[0].mxu0 %v1410
    %v1668 = vpop.f32.mrb[0].mxu0
    %v1669 = vadd.f32 %v1580, %v1668
    %v1670 = vpop.f32.mrb[0].mxu0
    %v1671 = vpop.f32.mrb[0].mxu0
    %v1672 = vadd.f32 %v1583, %v1671
    %v1673 = vpop.f32.mrb[0].mxu0
    %1674 = vdwg.mxu0
    %s1675 = scalar_lea.vmem %s8, 16
    %v1676 = vld [vmem:[%s1675] sm:$0xf]
    %v1677 = vld [vmem:[%s1675 + $0x4] sm:$0xf]
    %v1680 = vunpack.c.l.b16 %v1676
    %v1681 = vunpack.c.l.b16 %v1677
    %v1682 = vpack.c.b16 %v1681, %v1680
    %v1684 = vsel %vm1365, %v1682, 0
    %1686 = vmatprep.subr.bf16.mxu0 0
    %1687 = vmatpush1.bf16.msra.mxu0 %v1356
    %1688 = vmatprep.subr.bf16.mxu0 0
    %1689 = vmatpush1.bf16.msra.mxu0 %v1357
    %1690 = vmatprep.subr.bf16.mxu0 0
    %1691 = vmatpush1.bf16.msra.mxu0 0
    %1692 = vmatprep.subr.bf16.mxu0 0
    %1693 = vmatpush1.bf16.msra.mxu0 0
    %1694 = vmatprep.subr.bf16.mxu0 0
    %1695 = vmatpush1.bf16.msra.mxu0 0
    %1696 = vmatprep.subr.bf16.mxu0 0
    %1697 = vmatpush1.bf16.msra.mxu0 0
    %1698 = vmatprep.subr.bf16.mxu0 0
    %1699 = vmatpush1.bf16.msra.mxu0 0
    %1700 = vmatprep.subr.bf16.mxu0 0
    %1701 = vmatpush1.bf16.msra.mxu0 0
    %1702 = vmatprep.subr.bf16.mxu0 0
    %1703 = vmatpush1.bf16.msra.mxu0 0
    %1704 = vmatprep.subr.bf16.mxu0 0
    %1705 = vmatpush1.bf16.msra.mxu0 0
    %1706 = vmatprep.subr.bf16.mxu0 0
    %1707 = vmatpush1.bf16.msra.mxu0 0
    %1708 = vmatprep.subr.bf16.mxu0 0
    %1709 = vmatpush1.bf16.msra.mxu0 0
    %1710 = vmatprep.subr.bf16.mxu0 0
    %1711 = vmatpush1.bf16.msra.mxu0 0
    %1712 = vmatprep.subr.bf16.mxu0 0
    %1713 = vmatpush1.bf16.msra.mxu0 0
    %1714 = vmatprep.subr.bf16.mxu0 0
    %1715 = vmatpush1.bf16.msra.mxu0 0
    %1716 = vmatprep.subr.bf16.mxu0 0
    %1717 = vmatpush1.bf16.msra.mxu0 0
    %1718 = vmatprep.mubr.bf16.mxu0 0
    %1719 = vmatmul.mubr.bf16.gmra.mrb[0].mxu0 %v1684
    %v1720 = vpop.f32.mrb[0].mxu0
    %v1721 = vadd.f32 0.0, %v1720
    %v1722 = vpop.f32.mrb[0].mxu0
    %v1723 = vpop.f32.mrb[0].mxu0
    %v1724 = vadd.f32 0.0, %v1723
    %v1725 = vpop.f32.mrb[0].mxu0
    %1726 = vdwg.mxu0
    %v1727 = vpack.c.bf16 %v1724, %v1721
    %s1728 = scalar_lea.vmem %s7, 128
    %v1729 = vld [vmem:[%s1728] sm:$0xf]
    %v1730 = vld [vmem:[%s1728 + $0x4] sm:$0xf]
    %v1731 = vld [vmem:[%s1728 + $0x8] sm:$0xf]
    %v1732 = vld [vmem:[%s1728 + $0xc] sm:$0xf]
    %v1733 = vld [vmem:[%s1728 + $0x10] sm:$0xf]
    %v1734 = vld [vmem:[%s1728 + $0x14] sm:$0xf]
    %v1735 = vld [vmem:[%s1728 + $0x18] sm:$0xf]
    %v1736 = vld [vmem:[%s1728 + $0x1c] sm:$0xf]
    %v1737 = vld [vmem:[%s1728 + $0x20] sm:$0xf]
    %v1738 = vld [vmem:[%s1728 + $0x24] sm:$0xf]
    %v1739 = vld [vmem:[%s1728 + $0x28] sm:$0xf]
    %v1740 = vld [vmem:[%s1728 + $0x2c] sm:$0xf]
    %v1741 = vld [vmem:[%s1728 + $0x30] sm:$0xf]
    %v1742 = vld [vmem:[%s1728 + $0x34] sm:$0xf]
    %v1743 = vld [vmem:[%s1728 + $0x38] sm:$0xf]
    %v1744 = vld [vmem:[%s1728 + $0x3c] sm:$0xf]
    %v1761 = vunpack.c.l.b16 %v1729
    %v1762 = vunpack.c.l.b16 %v1730
    %v1763 = vunpack.c.l.b16 %v1731
    %v1764 = vunpack.c.l.b16 %v1732
    %v1765 = vunpack.c.l.b16 %v1733
    %v1766 = vunpack.c.l.b16 %v1734
    %v1767 = vunpack.c.l.b16 %v1735
    %v1768 = vunpack.c.l.b16 %v1736
    %v1769 = vunpack.c.l.b16 %v1737
    %v1770 = vunpack.c.l.b16 %v1738
    %v1771 = vunpack.c.l.b16 %v1739
    %v1772 = vunpack.c.l.b16 %v1740
    %v1773 = vunpack.c.l.b16 %v1741
    %v1774 = vunpack.c.l.b16 %v1742
    %v1775 = vunpack.c.l.b16 %v1743
    %v1776 = vunpack.c.l.b16 %v1744
    %v1777 = vpack.c.b16 %v1762, %v1761
    %v1778 = vpack.c.b16 %v1764, %v1763
    %v1779 = vpack.c.b16 %v1766, %v1765
    %v1780 = vpack.c.b16 %v1768, %v1767
    %v1781 = vpack.c.b16 %v1770, %v1769
    %v1782 = vpack.c.b16 %v1772, %v1771
    %v1783 = vpack.c.b16 %v1774, %v1773
    %v1784 = vpack.c.b16 %v1776, %v1775
    %1793 = vmatprep.subr.bf16.mxu0 0
    %1794 = vmatpush1.bf16.msra.mxu0 %v1777
    %1795 = vmatprep.subr.bf16.mxu0 0
    %1796 = vmatpush1.bf16.msra.mxu0 %v1778
    %1797 = vmatprep.subr.bf16.mxu0 0
    %1798 = vmatpush1.bf16.msra.mxu0 %v1779
    %1799 = vmatprep.subr.bf16.mxu0 0
    %1800 = vmatpush1.bf16.msra.mxu0 %v1780
    %1801 = vmatprep.subr.bf16.mxu0 0
    %1802 = vmatpush1.bf16.msra.mxu0 %v1781
    %1803 = vmatprep.subr.bf16.mxu0 0
    %1804 = vmatpush1.bf16.msra.mxu0 %v1782
    %1805 = vmatprep.subr.bf16.mxu0 0
    %1806 = vmatpush1.bf16.msra.mxu0 %v1783
    %1807 = vmatprep.subr.bf16.mxu0 0
    %1808 = vmatpush1.bf16.msra.mxu0 %v1784
    %1809 = vmatprep.subr.bf16.mxu0 0
    %1810 = vmatpush1.bf16.msra.mxu0 0
    %1811 = vmatprep.subr.bf16.mxu0 0
    %1812 = vmatpush1.bf16.msra.mxu0 0
    %1813 = vmatprep.subr.bf16.mxu0 0
    %1814 = vmatpush1.bf16.msra.mxu0 0
    %1815 = vmatprep.subr.bf16.mxu0 0
    %1816 = vmatpush1.bf16.msra.mxu0 0
    %1817 = vmatprep.subr.bf16.mxu0 0
    %1818 = vmatpush1.bf16.msra.mxu0 0
    %1819 = vmatprep.subr.bf16.mxu0 0
    %1820 = vmatpush1.bf16.msra.mxu0 0
    %1821 = vmatprep.subr.bf16.mxu0 0
    %1822 = vmatpush1.bf16.msra.mxu0 0
    %1823 = vmatprep.subr.bf16.mxu0 0
    %1824 = vmatpush1.bf16.msra.mxu0 0
    %1825 = vmatprep.mubr.bf16.mxu0 0
    %1826 = vmatmul.mubr.bf16.gmra.mrb[0].mxu0 %v1727
    %v1827 = vpop.f32.mrb[0].mxu0
    %v1828 = vadd.f32 0.0, %v1827
    %v1829 = vpop.f32.mrb[0].mxu0
    %v1830 = vpop.f32.mrb[0].mxu0
    %v1831 = vadd.f32 0.0, %v1830
    %v1832 = vpop.f32.mrb[0].mxu0
    %1833 = vdwg.mxu0
    %v1834 = vadd.f32 %v1669, %v1828
    %v1835 = vadd.f32 %v1672, %v1831
    %v1836 = vld [vmem:[%s9] sm:$0x1]
    %v1838 = vlaneseq
    %v1839 = vshrl.u32 %v1838, 7
    %v1840 = vsub.s32 0, %v1839
    %v1841 = vrot.slane %v1836, %v1840
    %v1843 = vadd.f32 %v1834, %v1841
    %v1844 = vadd.f32 %v1835, %v1841
    %vm1845 = vcmp.ge.f32.partialorder %v1843, 0.0
    %vm1846 = vcmp.ge.f32.partialorder %v1844, 0.0
    %v1847 = vmul.f32 %v1843, 0.2
    %v1848 = vmul.f32 %v1844, 0.2
    %v1849 = vsel %vm1845, %v1843, %v1847
    %v1850 = vsel %vm1846, %v1844, %v1848
    %v1851 = vpack.c.bf16 %v1850, %v1849
    %v1852 = vld [vmem:[%s10] sm:$0x3]
    %vm1853 = vcmask 130048
    %v1855 = vsel %vm1853, %v1852, 0
    %1857 = vmatprep.subr.bf16.mxu0 0
    %1858 = vmatpush1.bf16.msra.mxu0 %v1851
    %1859 = vmatprep.subr.bf16.mxu0 0
    %1860 = vmatpush1.bf16.msra.mxu0 0
    %1861 = vmatprep.subr.bf16.mxu0 0
    %1862 = vmatpush1.bf16.msra.mxu0 0
    %1863 = vmatprep.subr.bf16.mxu0 0
    %1864 = vmatpush1.bf16.msra.mxu0 0
    %1865 = vmatprep.subr.bf16.mxu0 0
    %1866 = vmatpush1.bf16.msra.mxu0 0
    %1867 = vmatprep.subr.bf16.mxu0 0
    %1868 = vmatpush1.bf16.msra.mxu0 0
    %1869 = vmatprep.subr.bf16.mxu0 0
    %1870 = vmatpush1.bf16.msra.mxu0 0
    %1871 = vmatprep.subr.bf16.mxu0 0
    %1872 = vmatpush1.bf16.msra.mxu0 0
    %1873 = vmatprep.subr.bf16.mxu0 0
    %1874 = vmatpush1.bf16.msra.mxu0 0
    %1875 = vmatprep.subr.bf16.mxu0 0
    %1876 = vmatpush1.bf16.msra.mxu0 0
    %1877 = vmatprep.subr.bf16.mxu0 0
    %1878 = vmatpush1.bf16.msra.mxu0 0
    %1879 = vmatprep.subr.bf16.mxu0 0
    %1880 = vmatpush1.bf16.msra.mxu0 0
    %1881 = vmatprep.subr.bf16.mxu0 0
    %1882 = vmatpush1.bf16.msra.mxu0 0
    %1883 = vmatprep.subr.bf16.mxu0 0
    %1884 = vmatpush1.bf16.msra.mxu0 0
    %1885 = vmatprep.subr.bf16.mxu0 0
    %1886 = vmatpush1.bf16.msra.mxu0 0
    %1887 = vmatprep.subr.bf16.mxu0 0
    %1888 = vmatpush1.bf16.msra.mxu0 0
    %1889 = vmatprep.mubr.bf16.mxu0 0
    %1890 = vmatmul.mubr.bf16.gmra.mrb[0].mxu0 %v1855
    %v1891 = vpop.f32.mrb[0].mxu0
    %v1892 = vadd.f32 0.0, %v1891
    %v1893 = vpop.f32.mrb[0].mxu0
    %v1894 = vpop.f32.mrb[0].mxu0
    %v1895 = vpop.f32.mrb[0].mxu0
    %1896 = vdwg.mxu0
    %v1897 = vpack.c.bf16 %v1892, %v1892
    %v1898 = vld [vmem:[%s11] sm:$0xf]
    %v1899 = vld [vmem:[%s11 + $0x4] sm:$0xf]
    %v1900 = vld [vmem:[%s11 + $0x8] sm:$0xf]
    %v1901 = vld [vmem:[%s11 + $0xc] sm:$0xf]
    %v1902 = vld [vmem:[%s11 + $0x10] sm:$0xf]
    %v1903 = vld [vmem:[%s11 + $0x14] sm:$0xf]
    %v1904 = vld [vmem:[%s11 + $0x18] sm:$0xf]
    %v1905 = vld [vmem:[%s11 + $0x1c] sm:$0xf]
    %s1906 = scalar_lea.vmem %s10, 2
    %v1907 = vld [vmem:[%s1906] sm:$0x3]
    %v1909 = vsel %vm1853, %v1907, 0
    %1911 = vmatprep.subr.bf16.mxu0 0
    %1912 = vmatpush1.bf16.msra.mxu0 %v1851
    %1913 = vmatprep.subr.bf16.mxu0 0
    %1914 = vmatpush1.bf16.msra.mxu0 0
    %1915 = vmatprep.subr.bf16.mxu0 0
    %1916 = vmatpush1.bf16.msra.mxu0 0
    %1917 = vmatprep.subr.bf16.mxu0 0
    %1918 = vmatpush1.bf16.msra.mxu0 0
    %1919 = vmatprep.subr.bf16.mxu0 0
    %1920 = vmatpush1.bf16.msra.mxu0 0
    %1921 = vmatprep.subr.bf16.mxu0 0
    %1922 = vmatpush1.bf16.msra.mxu0 0
    %1923 = vmatprep.subr.bf16.mxu0 0
    %1924 = vmatpush1.bf16.msra.mxu0 0
    %1925 = vmatprep.subr.bf16.mxu0 0
    %1926 = vmatpush1.bf16.msra.mxu0 0
    %1927 = vmatprep.subr.bf16.mxu0 0
    %1928 = vmatpush1.bf16.msra.mxu0 0
    %1929 = vmatprep.subr.bf16.mxu0 0
    %1930 = vmatpush1.bf16.msra.mxu0 0
    %1931 = vmatprep.subr.bf16.mxu0 0
    %1932 = vmatpush1.bf16.msra.mxu0 0
    %1933 = vmatprep.subr.bf16.mxu0 0
    %1934 = vmatpush1.bf16.msra.mxu0 0
    %1935 = vmatprep.subr.bf16.mxu0 0
    %1936 = vmatpush1.bf16.msra.mxu0 0
    %1937 = vmatprep.subr.bf16.mxu0 0
    %1938 = vmatpush1.bf16.msra.mxu0 0
    %1939 = vmatprep.subr.bf16.mxu0 0
    %1940 = vmatpush1.bf16.msra.mxu0 0
    %1941 = vmatprep.subr.bf16.mxu0 0
    %1942 = vmatpush1.bf16.msra.mxu0 0
    %1943 = vmatprep.mubr.bf16.mxu0 0
    %1944 = vmatmul.mubr.bf16.gmra.mrb[0].mxu0 %v1909
    %v1945 = vpop.f32.mrb[0].mxu0
    %v1946 = vadd.f32 0.0, %v1945
    %v1947 = vpop.f32.mrb[0].mxu0
    %v1948 = vpop.f32.mrb[0].mxu0
    %v1949 = vpop.f32.mrb[0].mxu0
    %1950 = vdwg.mxu0
    %v1951 = vpack.c.bf16 %v1946, %v1946
    %s1952 = scalar_lea.vmem %s11, 32
    %v1953 = vld [vmem:[%s1952] sm:$0xf]
    %v1954 = vld [vmem:[%s1952 + $0x4] sm:$0xf]
    %v1955 = vld [vmem:[%s1952 + $0x8] sm:$0xf]
    %v1956 = vld [vmem:[%s1952 + $0xc] sm:$0xf]
    %v1957 = vld [vmem:[%s1952 + $0x10] sm:$0xf]
    %v1958 = vld [vmem:[%s1952 + $0x14] sm:$0xf]
    %v1959 = vld [vmem:[%s1952 + $0x18] sm:$0xf]
    %v1960 = vld [vmem:[%s1952 + $0x1c] sm:$0xf]
    %v1969 = vunpack.c.l.b16 %v1953
    %v1970 = vunpack.c.l.b16 %v1954
    %v1971 = vunpack.c.l.b16 %v1955
    %v1972 = vunpack.c.l.b16 %v1956
    %v1973 = vunpack.c.l.b16 %v1957
    %v1974 = vunpack.c.l.b16 %v1958
    %v1975 = vunpack.c.l.b16 %v1959
    %v1976 = vunpack.c.l.b16 %v1960
    %v1977 = vpack.c.b16 %v1970, %v1969
    %v1978 = vpack.c.b16 %v1972, %v1971
    %v1979 = vpack.c.b16 %v1974, %v1973
    %v1980 = vpack.c.b16 %v1976, %v1975
    %v1986 = vsel %vm114, %v1951, 0
    %1988 = vmatprep.subr.bf16.mxu0 0
    %1989 = vmatpush1.bf16.msra.mxu0 %v1977
    %1990 = vmatprep.subr.bf16.mxu0 0
    %1991 = vmatpush1.bf16.msra.mxu0 %v1978
    %1992 = vmatprep.subr.bf16.mxu0 0
    %1993 = vmatpush1.bf16.msra.mxu0 %v1979
    %1994 = vmatprep.subr.bf16.mxu0 0
    %1995 = vmatpush1.bf16.msra.mxu0 %v1980
    %1996 = vmatprep.subr.bf16.mxu0 0
    %1997 = vmatpush1.bf16.msra.mxu0 0
    %1998 = vmatprep.subr.bf16.mxu0 0
    %1999 = vmatpush1.bf16.msra.mxu0 0
    %2000 = vmatprep.subr.bf16.mxu0 0
    %2001 = vmatpush1.bf16.msra.mxu0 0
    %2002 = vmatprep.subr.bf16.mxu0 0
    %2003 = vmatpush1.bf16.msra.mxu0 0
    %2004 = vmatprep.subr.bf16.mxu0 0
    %2005 = vmatpush1.bf16.msra.mxu0 0
    %2006 = vmatprep.subr.bf16.mxu0 0
    %2007 = vmatpush1.bf16.msra.mxu0 0
    %2008 = vmatprep.subr.bf16.mxu0 0
    %2009 = vmatpush1.bf16.msra.mxu0 0
    %2010 = vmatprep.subr.bf16.mxu0 0
    %2011 = vmatpush1.bf16.msra.mxu0 0
    %2012 = vmatprep.subr.bf16.mxu0 0
    %2013 = vmatpush1.bf16.msra.mxu0 0
    %2014 = vmatprep.subr.bf16.mxu0 0
    %2015 = vmatpush1.bf16.msra.mxu0 0
    %2016 = vmatprep.subr.bf16.mxu0 0
    %2017 = vmatpush1.bf16.msra.mxu0 0
    %2018 = vmatprep.subr.bf16.mxu0 0
    %2019 = vmatpush1.bf16.msra.mxu0 0
    %2020 = vmatprep.mubr.bf16.mxu0 0
    %2021 = vmatmul.mubr.bf16.gmra.mrb[0].mxu0 %v1986
    %v2022 = vpop.f32.mrb[0].mxu0
    %v2023 = vadd.f32 0.0, %v2022
    %v2024 = vpop.f32.mrb[0].mxu0
    %v2025 = vpop.f32.mrb[0].mxu0
    %v2026 = vpop.f32.mrb[0].mxu0
    %2027 = vdwg.mxu0
    %v2036 = vunpack.c.l.b16 %v1898
    %v2037 = vunpack.c.l.b16 %v1899
    %v2038 = vunpack.c.l.b16 %v1900
    %v2039 = vunpack.c.l.b16 %v1901
    %v2040 = vunpack.c.l.b16 %v1902
    %v2041 = vunpack.c.l.b16 %v1903
    %v2042 = vunpack.c.l.b16 %v1904
    %v2043 = vunpack.c.l.b16 %v1905
    %v2044 = vpack.c.b16 %v2037, %v2036
    %v2045 = vpack.c.b16 %v2039, %v2038
    %v2046 = vpack.c.b16 %v2041, %v2040
    %v2047 = vpack.c.b16 %v2043, %v2042
    %v2053 = vsel %vm114, %v1897, 0
    %2055 = vmatprep.subr.bf16.mxu0 0
    %2056 = vmatpush1.bf16.msra.mxu0 %v2044
    %2057 = vmatprep.subr.bf16.mxu0 0
    %2058 = vmatpush1.bf16.msra.mxu0 %v2045
    %2059 = vmatprep.subr.bf16.mxu0 0
    %2060 = vmatpush1.bf16.msra.mxu0 %v2046
    %2061 = vmatprep.subr.bf16.mxu0 0
    %2062 = vmatpush1.bf16.msra.mxu0 %v2047
    %2063 = vmatprep.subr.bf16.mxu0 0
    %2064 = vmatpush1.bf16.msra.mxu0 0
    %2065 = vmatprep.subr.bf16.mxu0 0
    %2066 = vmatpush1.bf16.msra.mxu0 0
    %2067 = vmatprep.subr.bf16.mxu0 0
    %2068 = vmatpush1.bf16.msra.mxu0 0
    %2069 = vmatprep.subr.bf16.mxu0 0
    %2070 = vmatpush1.bf16.msra.mxu0 0
    %2071 = vmatprep.subr.bf16.mxu0 0
    %2072 = vmatpush1.bf16.msra.mxu0 0
    %2073 = vmatprep.subr.bf16.mxu0 0
    %2074 = vmatpush1.bf16.msra.mxu0 0
    %2075 = vmatprep.subr.bf16.mxu0 0
    %2076 = vmatpush1.bf16.msra.mxu0 0
    %2077 = vmatprep.subr.bf16.mxu0 0
    %2078 = vmatpush1.bf16.msra.mxu0 0
    %2079 = vmatprep.subr.bf16.mxu0 0
    %2080 = vmatpush1.bf16.msra.mxu0 0
    %2081 = vmatprep.subr.bf16.mxu0 0
    %2082 = vmatpush1.bf16.msra.mxu0 0
    %2083 = vmatprep.subr.bf16.mxu0 0
    %2084 = vmatpush1.bf16.msra.mxu0 0
    %2085 = vmatprep.subr.bf16.mxu0 0
    %2086 = vmatpush1.bf16.msra.mxu0 0
    %2087 = vmatprep.mubr.bf16.mxu0 0
    %2088 = vmatmul.mubr.bf16.gmra.mrb[0].mxu0 %v2053
    %v2089 = vpop.f32.mrb[0].mxu0
    %v2090 = vadd.f32 %v2023, %v2089
    %v2091 = vpop.f32.mrb[0].mxu0
    %v2092 = vpop.f32.mrb[0].mxu0
    %v2093 = vpop.f32.mrb[0].mxu0
    %2094 = vdwg.mxu0
    %s2095 = scalar_lea.vmem %s10, 4
    %v2096 = vld [vmem:[%s2095] sm:$0x3]
    %v2098 = vsel %vm1853, %v2096, 0
    %2100 = vmatprep.subr.bf16.mxu0 0
    %2101 = vmatpush1.bf16.msra.mxu0 %v1851
    %2102 = vmatprep.subr.bf16.mxu0 0
    %2103 = vmatpush1.bf16.msra.mxu0 0
    %2104 = vmatprep.subr.bf16.mxu0 0
    %2105 = vmatpush1.bf16.msra.mxu0 0
    %2106 = vmatprep.subr.bf16.mxu0 0
    %2107 = vmatpush1.bf16.msra.mxu0 0
    %2108 = vmatprep.subr.bf16.mxu0 0
    %2109 = vmatpush1.bf16.msra.mxu0 0
    %2110 = vmatprep.subr.bf16.mxu0 0
    %2111 = vmatpush1.bf16.msra.mxu0 0
    %2112 = vmatprep.subr.bf16.mxu0 0
    %2113 = vmatpush1.bf16.msra.mxu0 0
    %2114 = vmatprep.subr.bf16.mxu0 0
    %2115 = vmatpush1.bf16.msra.mxu0 0
    %2116 = vmatprep.subr.bf16.mxu0 0
    %2117 = vmatpush1.bf16.msra.mxu0 0
    %2118 = vmatprep.subr.bf16.mxu0 0
    %2119 = vmatpush1.bf16.msra.mxu0 0
    %2120 = vmatprep.subr.bf16.mxu0 0
    %2121 = vmatpush1.bf16.msra.mxu0 0
    %2122 = vmatprep.subr.bf16.mxu0 0
    %2123 = vmatpush1.bf16.msra.mxu0 0
    %2124 = vmatprep.subr.bf16.mxu0 0
    %2125 = vmatpush1.bf16.msra.mxu0 0
    %2126 = vmatprep.subr.bf16.mxu0 0
    %2127 = vmatpush1.bf16.msra.mxu0 0
    %2128 = vmatprep.subr.bf16.mxu0 0
    %2129 = vmatpush1.bf16.msra.mxu0 0
    %2130 = vmatprep.subr.bf16.mxu0 0
    %2131 = vmatpush1.bf16.msra.mxu0 0
    %2132 = vmatprep.mubr.bf16.mxu0 0
    %2133 = vmatmul.mubr.bf16.gmra.mrb[0].mxu0 %v2098
    %v2134 = vpop.f32.mrb[0].mxu0
    %v2135 = vadd.f32 0.0, %v2134
    %v2136 = vpop.f32.mrb[0].mxu0
    %v2137 = vpop.f32.mrb[0].mxu0
    %v2138 = vpop.f32.mrb[0].mxu0
    %2139 = vdwg.mxu0
    %v2140 = vpack.c.bf16 %v2135, %v2135
    %s2141 = scalar_lea.vmem %s11, 64
    %v2142 = vld [vmem:[%s2141] sm:$0xf]
    %v2143 = vld [vmem:[%s2141 + $0x4] sm:$0xf]
    %v2144 = vld [vmem:[%s2141 + $0x8] sm:$0xf]
    %v2145 = vld [vmem:[%s2141 + $0xc] sm:$0xf]
    %v2146 = vld [vmem:[%s2141 + $0x10] sm:$0xf]
    %v2147 = vld [vmem:[%s2141 + $0x14] sm:$0xf]
    %v2148 = vld [vmem:[%s2141 + $0x18] sm:$0xf]
    %v2149 = vld [vmem:[%s2141 + $0x1c] sm:$0xf]
    %v2158 = vunpack.c.l.b16 %v2142
    %v2159 = vunpack.c.l.b16 %v2143
    %v2160 = vunpack.c.l.b16 %v2144
    %v2161 = vunpack.c.l.b16 %v2145
    %v2162 = vunpack.c.l.b16 %v2146
    %v2163 = vunpack.c.l.b16 %v2147
    %v2164 = vunpack.c.l.b16 %v2148
    %v2165 = vunpack.c.l.b16 %v2149
    %v2166 = vpack.c.b16 %v2159, %v2158
    %v2167 = vpack.c.b16 %v2161, %v2160
    %v2168 = vpack.c.b16 %v2163, %v2162
    %v2169 = vpack.c.b16 %v2165, %v2164
    %v2175 = vsel %vm114, %v2140, 0
    %2177 = vmatprep.subr.bf16.mxu0 0
    %2178 = vmatpush1.bf16.msra.mxu0 %v2166
    %2179 = vmatprep.subr.bf16.mxu0 0
    %2180 = vmatpush1.bf16.msra.mxu0 %v2167
    %2181 = vmatprep.subr.bf16.mxu0 0
    %2182 = vmatpush1.bf16.msra.mxu0 %v2168
    %2183 = vmatprep.subr.bf16.mxu0 0
    %2184 = vmatpush1.bf16.msra.mxu0 %v2169
    %2185 = vmatprep.subr.bf16.mxu0 0
    %2186 = vmatpush1.bf16.msra.mxu0 0
    %2187 = vmatprep.subr.bf16.mxu0 0
    %2188 = vmatpush1.bf16.msra.mxu0 0
    %2189 = vmatprep.subr.bf16.mxu0 0
    %2190 = vmatpush1.bf16.msra.mxu0 0
    %2191 = vmatprep.subr.bf16.mxu0 0
    %2192 = vmatpush1.bf16.msra.mxu0 0
    %2193 = vmatprep.subr.bf16.mxu0 0
    %2194 = vmatpush1.bf16.msra.mxu0 0
    %2195 = vmatprep.subr.bf16.mxu0 0
    %2196 = vmatpush1.bf16.msra.mxu0 0
    %2197 = vmatprep.subr.bf16.mxu0 0
    %2198 = vmatpush1.bf16.msra.mxu0 0
    %2199 = vmatprep.subr.bf16.mxu0 0
    %2200 = vmatpush1.bf16.msra.mxu0 0
    %2201 = vmatprep.subr.bf16.mxu0 0
    %2202 = vmatpush1.bf16.msra.mxu0 0
    %2203 = vmatprep.subr.bf16.mxu0 0
    %2204 = vmatpush1.bf16.msra.mxu0 0
    %2205 = vmatprep.subr.bf16.mxu0 0
    %2206 = vmatpush1.bf16.msra.mxu0 0
    %2207 = vmatprep.subr.bf16.mxu0 0
    %2208 = vmatpush1.bf16.msra.mxu0 0
    %2209 = vmatprep.mubr.bf16.mxu0 0
    %2210 = vmatmul.mubr.bf16.gmra.mrb[0].mxu0 %v2175
    %v2211 = vpop.f32.mrb[0].mxu0
    %v2212 = vadd.f32 0.0, %v2211
    %v2213 = vpop.f32.mrb[0].mxu0
    %v2214 = vpop.f32.mrb[0].mxu0
    %v2215 = vpop.f32.mrb[0].mxu0
    %2216 = vdwg.mxu0
    %v2217 = vadd.f32 %v2090, %v2212
    %s2218 = scalar_lea.vmem %s10, 6
    %v2219 = vld [vmem:[%s2218] sm:$0x3]
    %v2221 = vsel %vm1853, %v2219, 0
    %2223 = vmatprep.subr.bf16.mxu0 0
    %2224 = vmatpush1.bf16.msra.mxu0 %v1851
    %2225 = vmatprep.subr.bf16.mxu0 0
    %2226 = vmatpush1.bf16.msra.mxu0 0
    %2227 = vmatprep.subr.bf16.mxu0 0
    %2228 = vmatpush1.bf16.msra.mxu0 0
    %2229 = vmatprep.subr.bf16.mxu0 0
    %2230 = vmatpush1.bf16.msra.mxu0 0
    %2231 = vmatprep.subr.bf16.mxu0 0
    %2232 = vmatpush1.bf16.msra.mxu0 0
    %2233 = vmatprep.subr.bf16.mxu0 0
    %2234 = vmatpush1.bf16.msra.mxu0 0
    %2235 = vmatprep.subr.bf16.mxu0 0
    %2236 = vmatpush1.bf16.msra.mxu0 0
    %2237 = vmatprep.subr.bf16.mxu0 0
    %2238 = vmatpush1.bf16.msra.mxu0 0
    %2239 = vmatprep.subr.bf16.mxu0 0
    %2240 = vmatpush1.bf16.msra.mxu0 0
    %2241 = vmatprep.subr.bf16.mxu0 0
    %2242 = vmatpush1.bf16.msra.mxu0 0
    %2243 = vmatprep.subr.bf16.mxu0 0
    %2244 = vmatpush1.bf16.msra.mxu0 0
    %2245 = vmatprep.subr.bf16.mxu0 0
    %2246 = vmatpush1.bf16.msra.mxu0 0
    %2247 = vmatprep.subr.bf16.mxu0 0
    %2248 = vmatpush1.bf16.msra.mxu0 0
    %2249 = vmatprep.subr.bf16.mxu0 0
    %2250 = vmatpush1.bf16.msra.mxu0 0
    %2251 = vmatprep.subr.bf16.mxu0 0
    %2252 = vmatpush1.bf16.msra.mxu0 0
    %2253 = vmatprep.subr.bf16.mxu0 0
    %2254 = vmatpush1.bf16.msra.mxu0 0
    %2255 = vmatprep.mubr.bf16.mxu0 0
    %2256 = vmatmul.mubr.bf16.gmra.mrb[0].mxu0 %v2221
    %v2257 = vpop.f32.mrb[0].mxu0
    %v2258 = vadd.f32 0.0, %v2257
    %v2259 = vpop.f32.mrb[0].mxu0
    %v2260 = vpop.f32.mrb[0].mxu0
    %v2261 = vpop.f32.mrb[0].mxu0
    %2262 = vdwg.mxu0
    %v2263 = vpack.c.bf16 %v2258, %v2258
    %s2264 = scalar_lea.vmem %s11, 96
    %v2265 = vld [vmem:[%s2264] sm:$0xf]
    %v2266 = vld [vmem:[%s2264 + $0x4] sm:$0xf]
    %v2267 = vld [vmem:[%s2264 + $0x8] sm:$0xf]
    %v2268 = vld [vmem:[%s2264 + $0xc] sm:$0xf]
    %v2269 = vld [vmem:[%s2264 + $0x10] sm:$0xf]
    %v2270 = vld [vmem:[%s2264 + $0x14] sm:$0xf]
    %v2271 = vld [vmem:[%s2264 + $0x18] sm:$0xf]
    %v2272 = vld [vmem:[%s2264 + $0x1c] sm:$0xf]
    %v2281 = vunpack.c.l.b16 %v2265
    %v2282 = vunpack.c.l.b16 %v2266
    %v2283 = vunpack.c.l.b16 %v2267
    %v2284 = vunpack.c.l.b16 %v2268
    %v2285 = vunpack.c.l.b16 %v2269
    %v2286 = vunpack.c.l.b16 %v2270
    %v2287 = vunpack.c.l.b16 %v2271
    %v2288 = vunpack.c.l.b16 %v2272
    %v2289 = vpack.c.b16 %v2282, %v2281
    %v2290 = vpack.c.b16 %v2284, %v2283
    %v2291 = vpack.c.b16 %v2286, %v2285
    %v2292 = vpack.c.b16 %v2288, %v2287
    %v2298 = vsel %vm114, %v2263, 0
    %2300 = vmatprep.subr.bf16.mxu0 0
    %2301 = vmatpush1.bf16.msra.mxu0 %v2289
    %2302 = vmatprep.subr.bf16.mxu0 0
    %2303 = vmatpush1.bf16.msra.mxu0 %v2290
    %2304 = vmatprep.subr.bf16.mxu0 0
    %2305 = vmatpush1.bf16.msra.mxu0 %v2291
    %2306 = vmatprep.subr.bf16.mxu0 0
    %2307 = vmatpush1.bf16.msra.mxu0 %v2292
    %2308 = vmatprep.subr.bf16.mxu0 0
    %2309 = vmatpush1.bf16.msra.mxu0 0
    %2310 = vmatprep.subr.bf16.mxu0 0
    %2311 = vmatpush1.bf16.msra.mxu0 0
    %2312 = vmatprep.subr.bf16.mxu0 0
    %2313 = vmatpush1.bf16.msra.mxu0 0
    %2314 = vmatprep.subr.bf16.mxu0 0
    %2315 = vmatpush1.bf16.msra.mxu0 0
    %2316 = vmatprep.subr.bf16.mxu0 0
    %2317 = vmatpush1.bf16.msra.mxu0 0
    %2318 = vmatprep.subr.bf16.mxu0 0
    %2319 = vmatpush1.bf16.msra.mxu0 0
    %2320 = vmatprep.subr.bf16.mxu0 0
    %2321 = vmatpush1.bf16.msra.mxu0 0
    %2322 = vmatprep.subr.bf16.mxu0 0
    %2323 = vmatpush1.bf16.msra.mxu0 0
    %2324 = vmatprep.subr.bf16.mxu0 0
    %2325 = vmatpush1.bf16.msra.mxu0 0
    %2326 = vmatprep.subr.bf16.mxu0 0
    %2327 = vmatpush1.bf16.msra.mxu0 0
    %2328 = vmatprep.subr.bf16.mxu0 0
    %2329 = vmatpush1.bf16.msra.mxu0 0
    %2330 = vmatprep.subr.bf16.mxu0 0
    %2331 = vmatpush1.bf16.msra.mxu0 0
    %2332 = vmatprep.mubr.bf16.mxu0 0
    %2333 = vmatmul.mubr.bf16.gmra.mrb[0].mxu0 %v2298
    %v2334 = vpop.f32.mrb[0].mxu0
    %v2335 = vadd.f32 0.0, %v2334
    %v2336 = vpop.f32.mrb[0].mxu0
    %v2337 = vpop.f32.mrb[0].mxu0
    %v2338 = vpop.f32.mrb[0].mxu0
    %2339 = vdwg.mxu0
    %v2340 = vadd.f32 %v2217, %v2335
    %v2341 = vld [vmem:[%s12] sm:$0x1]
    %v2343 = vlaneseq
    %v2344 = vshrl.u32 %v2343, 7
    %v2345 = vsub.s32 0, %v2344
    %v2346 = vrot.slane %v2341, %v2345
    %v2348 = vadd.f32 %v2340, %v2346
    %vm2349 = vcmp.ge.f32.partialorder %v2348, 0.0
    %v2350 = vmul.f32 %v2348, 0.2
    %v2351 = vsel %vm2349, %v2348, %v2350
    %v2352 = vpack.c.bf16 %v2351, %v2351
    %v2353 = vld [vmem:[%s13] sm:$0xf]
    %v2354 = vld [vmem:[%s13 + $0x4] sm:$0xf]
    %v2355 = vld [vmem:[%s13 + $0x8] sm:$0xf]
    %v2356 = vld [vmem:[%s13 + $0xc] sm:$0xf]
    %v2357 = vld [vmem:[#allocation2] sm:$0x1]
    %v2359 = vlaneseq
    %v2360 = vshrl.u32 %v2359, 7
    %v2361 = vsub.s32 0, %v2360
    %v2362 = vrot.slane %v2357, %v2361
    %v2368 = vunpack.c.l.b16 %v2353
    %v2369 = vunpack.c.l.b16 %v2354
    %v2370 = vunpack.c.l.b16 %v2355
    %v2371 = vunpack.c.l.b16 %v2356
    %v2372 = vpack.c.b16 %v2369, %v2368
    %v2373 = vpack.c.b16 %v2371, %v2370
    %v2377 = vsel %vm1365, %v2352, 0
    %2379 = vmatprep.subr.bf16.mxu0 0
    %2380 = vmatpush1.bf16.msra.mxu0 %v2372
    %2381 = vmatprep.subr.bf16.mxu0 0
    %2382 = vmatpush1.bf16.msra.mxu0 %v2373
    %2383 = vmatprep.subr.bf16.mxu0 0
    %2384 = vmatpush1.bf16.msra.mxu0 0
    %2385 = vmatprep.subr.bf16.mxu0 0
    %2386 = vmatpush1.bf16.msra.mxu0 0
    %2387 = vmatprep.subr.bf16.mxu0 0
    %2388 = vmatpush1.bf16.msra.mxu0 0
    %2389 = vmatprep.subr.bf16.mxu0 0
    %2390 = vmatpush1.bf16.msra.mxu0 0
    %2391 = vmatprep.subr.bf16.mxu0 0
    %2392 = vmatpush1.bf16.msra.mxu0 0
    %2393 = vmatprep.subr.bf16.mxu0 0
    %2394 = vmatpush1.bf16.msra.mxu0 0
    %2395 = vmatprep.subr.bf16.mxu0 0
    %2396 = vmatpush1.bf16.msra.mxu0 0
    %2397 = vmatprep.subr.bf16.mxu0 0
    %2398 = vmatpush1.bf16.msra.mxu0 0
    %2399 = vmatprep.subr.bf16.mxu0 0
    %2400 = vmatpush1.bf16.msra.mxu0 0
    %2401 = vmatprep.subr.bf16.mxu0 0
    %2402 = vmatpush1.bf16.msra.mxu0 0
    %2403 = vmatprep.subr.bf16.mxu0 0
    %2404 = vmatpush1.bf16.msra.mxu0 0
    %2405 = vmatprep.subr.bf16.mxu0 0
    %2406 = vmatpush1.bf16.msra.mxu0 0
    %2407 = vmatprep.subr.bf16.mxu0 0
    %2408 = vmatpush1.bf16.msra.mxu0 0
    %2409 = vmatprep.subr.bf16.mxu0 0
    %2410 = vmatpush1.bf16.msra.mxu0 0
    %2411 = vmatprep.mubr.bf16.mxu0 0
    %2412 = vmatmul.mubr.bf16.gmra.mrb[0].mxu0 %v2377
    %v2413 = vpop.f32.mrb[0].mxu0
    %v2414 = vadd.f32 %v2362, %v2413
    %v2415 = vpop.f32.mrb[0].mxu0
    %v2416 = vpop.f32.mrb[0].mxu0
    %v2417 = vpop.f32.mrb[0].mxu0
    %2418 = vdwg.mxu0
    %v2419 = vmax.f32 %v2414, 0.0
    %v2420 = vand.u32 2147483647, %v2414
    %v2421 = vsub.f32 0.0, %v2420
    %v2422 = vmul.f32 %v2421, 1.442695
    %v2423 = vpow.pop %v2422
    %v2424 = vadd.f32 %v2423, 1.0
    %v2425 = vlog2.pop %v2424
    %v2426 = vmul.f32 %v2425, 0.6931472
    %v2427 = vmul.f32 -0.5, %v2423
    %v2428 = vadd.f32 %v2427, 1.0
    %v2429 = vmul.f32 %v2428, %v2423
    %v2430 = vand.u32 2147483647, %v2423
    %vm2431 = vcmp.lt.f32.partialorder %v2430, 0.0004427343
    %v2432 = vsel %vm2431, %v2429, %v2426
    %v2433 = vadd.f32 %v2419, %v2432
    %vm2434 = vcmask 1024
    %v2435 = vsel %vm2434, %v2433, 0.0
    %2436 = vadd.xlane.f32.xlu0 %v2435
    %v2437 = vpop.xlane.xlu0 %2436
    %v2438 = vrot.slane %v2437, 4
    %v2439 = vadd.f32 %v2437, %v2438
    %v2440 = vrot.slane %v2439, 2
    %v2441 = vadd.f32 %v2439, %v2440
    %v2442 = vrot.slane %v2441, 1
    %v2443 = vadd.f32 %v2441, %v2442
    %s2444 = vtos %v2443
    %v2445 = vrcp.pop 2.0
    %s2446 = vtos %v2445
    %s2447 = smul.f32 %s2444, %s2446
    %v2448 = vsub.f32 0.0, %v2414
    %v2449 = vmax.f32 %v2448, 0.0
    %v2450 = vand.u32 2147483647, %v2448
    %v2451 = vsub.f32 0.0, %v2450
    %v2452 = vmul.f32 %v2451, 1.442695
    %v2453 = vpow.pop %v2452
    %v2454 = vadd.f32 %v2453, 1.0
    %v2455 = vlog2.pop %v2454
    %v2456 = vmul.f32 %v2455, 0.6931472
    %v2457 = vmul.f32 -0.5, %v2453
    %v2458 = vadd.f32 %v2457, 1.0
    %v2459 = vmul.f32 %v2458, %v2453
    %v2460 = vand.u32 2147483647, %v2453
    %vm2461 = vcmp.lt.f32.partialorder %v2460, 0.0004427343
    %v2462 = vsel %vm2461, %v2459, %v2456
    %v2463 = vadd.f32 %v2449, %v2462
    %v2465 = vrot.slane %v2463, 2
    %v2467 = vsel %vm2434, %v2465, 0.0
    %2468 = vadd.xlane.f32.xlu0 %v2467
    %v2469 = vpop.xlane.xlu0 %2468
    %v2470 = vrot.slane %v2469, 4
    %v2471 = vadd.f32 %v2469, %v2470
    %v2472 = vrot.slane %v2471, 2
    %v2473 = vadd.f32 %v2471, %v2472
    %v2474 = vrot.slane %v2473, 1
    %v2475 = vadd.f32 %v2473, %v2474
    %s2476 = vtos %v2475
    %v2477 = vrcp.pop 2.0
    %s2478 = vtos %v2477
    %s2479 = smul.f32 %s2476, %s2478
    %s2480 = sadd.f32 %s2447, %s2479
    %s2481 = scalar_lea.smem [#allocation3], 0
    %2482 = sst [smem:[%s2481]] %s2480
    %v2483 = vsel %vm2434, %v2463, 0.0
    %2484 = vadd.xlane.f32.xlu0 %v2483
    %v2485 = vpop.xlane.xlu0 %2484
    %v2486 = vrot.slane %v2485, 4
    %v2487 = vadd.f32 %v2485, %v2486
    %v2488 = vrot.slane %v2487, 2
    %v2489 = vadd.f32 %v2487, %v2488
    %v2490 = vrot.slane %v2489, 1
    %v2491 = vadd.f32 %v2489, %v2490
    %s2492 = vtos %v2491
    %v2493 = vrcp.pop 2.0
    %s2494 = vtos %v2493
    %s2495 = smul.f32 %s2492, %s2494
    %s2496 = scalar_lea.smem [#allocation3], 1
    %2497 = sst [smem:[%s2496]] %s2495
    // Predicated region
    $region62: #{adversarial_forward.1} parent=1 // pred_check
      _
    $region63: #{adversarial_forward.1} parent=1 // pred_check_branch
      %2499 = sbr.rel (0) target = $region65
    $region64: #{adversarial_forward.1} parent=1 // pred_region
      %s2501 = ssub.s32 16, 16
      %2502 = vsyncadd [#allocation4], %s2501
      %s2504 = sshll.u32 %s15, 4
      %s2505 = int_to_ptr.vmem [resolvable:$true] %s2504
      %2507 = dma.smem_to_vmem [#allocation3], 16, %s2505, [#allocation4]
    $region65: #{adversarial_forward.1} parent=1 // pred_fallthru
      _
    // Predicated region
    $region66: #{adversarial_forward.1} parent=1 // pred_check
      _
    $region67: #{adversarial_forward.1} parent=1 // pred_check_branch
      %2509 = sbr.rel (0) target = $region69
    $region68: #{adversarial_forward.1} parent=1 // pred_region
      %2510 = dma.done [#allocation4], 16
    $region69: #{adversarial_forward.1} parent=1 // pred_fallthru
      _
    %2511 = sfence
    %2512 = vsyncpa [#allocation4], 1

</llo_original>
